<compile_context>
chip_gen: v5e
topology: v5e:2x2
jax: 0.10.0
libtpu: 0.0.40
codegen_flags: <defaults>
</compile_context>

<pallas_src>
import jax
import jax.numpy as jnp
from jax.experimental import pallas as pl
from jax.experimental.pallas import tpu as pltpu


def _classifier_kernel(ids_ref, mask_ref, table_ref, wp_ref, bp_ref,
                       wc_ref, bc_ref, out_ref, hist_ref, cnt_ref):
    """Fused gather (as masked vocab histogram) -> mean pool -> tanh pooler -> classifier."""
    s = pl.program_id(1)

    # Zero the per-batch-tile accumulators at the start of the S reduction.
    @pl.when(s == 0)
    def _():
        hist_ref[...] = jnp.zeros_like(hist_ref)
        cnt_ref[...] = jnp.zeros_like(cnt_ref)

    ids = ids_ref[...]                                   # (tb, ts) int32
    mask = mask_ref[...]                                 # (tb, ts) f32
    tb, ts = ids.shape
    v = hist_ref.shape[1]

    # Masked one-hot histogram over the vocab for this seq tile:
    #   hist[b, v] += sum_s mask[b, s] * [ids[b, s] == v]
    vocab_iota = jax.lax.broadcasted_iota(jnp.int32, (tb, ts, v), 2)
    onehot = (ids[:, :, None] == vocab_iota).astype(jnp.float32)    # (tb, ts, V)
    hist_ref[...] += jnp.sum(onehot * mask[:, :, None], axis=1)     # (tb, V)
    cnt_ref[...] += jnp.sum(mask, axis=1, keepdims=True)            # (tb, 1)

    # On the last sequence step: pooled sum via one hist @ table matmul,
    # exact mean divide, pooler dense + tanh, classifier matmul + bias
    # (lane-dense padded output width).
    @pl.when(s == pl.num_programs(1) - 1)
    def _():
        hist = hist_ref[...]                                        # (tb, V)
        cnt = jnp.maximum(cnt_ref[...], 1.0)                        # (tb, 1)

        # Fused embedding gather + masked sum: hist @ table (counts are small
        # integers, table is bf16-exact -> matmul is exact in f32 accumulation).
        pooled_sum = jnp.dot(hist, table_ref[...].astype(jnp.float32),
                             preferred_element_type=jnp.float32)    # (tb, D)
        pooled = pooled_sum / cnt                                    # exact divide

        pooler = jnp.tanh(
            jnp.dot(pooled, wp_ref[...], preferred_element_type=jnp.float32)
            + bp_ref[...]
        )                                                            # (tb, D)

        logits = (
            jnp.dot(pooler, wc_ref[...], preferred_element_type=jnp.float32)
            + bc_ref[...]
        )                                                            # (tb, CP)
        out_ref[...] = logits.astype(out_ref.dtype)


def _pick_tiles(batch, seq, vocab):
    """Batch/seq tiles: big, lane-dense, VMEM-budgeted; single step when tiny."""
    # Batch tile: largest multiple of 8 that divides B, capped at 128.
    tb = batch
    for cand in (128, 64, 32, 16, 8):
        if batch % cand == 0:
            tb = cand
            break
    # v7x megacore: keep >= 2 batch grid steps when the batch is big enough to
    # matter (otherwise collapse the grid for tiny problems).
    if batch // tb < 2 and batch >= 32 and batch % 16 == 0:
        tb = batch // 2

    # Seq tile: multiple of 128 (lane-dense int32/f32 blocks) or the full S.
    # Budget the per-step one-hot temporary (tb * ts * max(V,128) * 4 B).
    lane_v = max(vocab, 128)
    budget_elems = (16 << 20) // (4 * lane_v)
    ts = seq
    if seq % 128 == 0:
        ts = 128
        for cand in (1024, 512, 256, 128):
            if seq % cand == 0 and tb * cand <= budget_elems:
                ts = cand
                break
    return tb, ts


def _vmem_limit_bytes():
    try:
        cap = int(pltpu.get_tpu_info().vmem_capacity_bytes)
    except Exception:
        cap = 64 << 20                      # conservative (v7x per-TC VMEM)
    # ~48 MiB on v7x (64 MiB physical), ~96 MiB on v5e/v6e (128 MiB physical).
    return min(100 << 20, (cap * 3) // 4)


def embedding_classifier_forward(input_ids, attention_mask, params,
                                 *, tb=None, ts=None):
    """Fully fused gather + masked-mean pool + pooler + classifier in one Pallas kernel."""
    emb_table = params["embedding"]                     # (V, D) bf16, VMEM-resident
    # Wp/Wc kept f32 for exact parity with the f32 reference at D=128; for real
    # CLIP/BERT widths cast these to bf16 (native MXU path, half the footprint).
    wp = params["pooler_w"].astype(jnp.float32)         # (D, D)
    bp = params["pooler_b"].astype(jnp.float32)         # (D,)
    wc = params["cls_w"].astype(jnp.float32)            # (D, C)
    bc = params["cls_b"].astype(jnp.float32)            # (C,)

    B, S = input_ids.shape
    V, D = emb_table.shape
    C = wc.shape[1]
    CP = ((C + 127) // 128) * 128                       # lane-dense padded width

    auto_tb, auto_ts = _pick_tiles(B, S, V)
    tb = auto_tb if tb is None else tb
    ts = auto_ts if ts is None else ts
    assert B % tb == 0 and S % ts == 0, (B, tb, S, ts)
    assert tb % 8 == 0 or tb == B, (B, tb)
    assert ts % 128 == 0 or ts == S, (S, ts)

    ids = input_ids.astype(jnp.int32)                   # (B, S) lane-dense
    mask = attention_mask.astype(jnp.float32)           # (B, S) lane-dense

    bp2 = bp.reshape(1, D)
    wc_pad = jnp.zeros((D, CP), jnp.float32).at[:, :C].set(wc)
    bc_pad = jnp.zeros((1, CP), jnp.float32).at[:, :C].set(bc)

    grid = (B // tb, S // ts)                           # (parallel, reduction)

    out_padded = pl.pallas_call(
        _classifier_kernel,
        out_shape=jax.ShapeDtypeStruct((B, CP), jnp.float32),
        grid_spec=pltpu.PrefetchScalarGridSpec(
            num_scalar_prefetch=0,
            grid=grid,
            in_specs=[
                pl.BlockSpec((tb, ts), lambda b, s: (b, s)),    # input_ids tile
                pl.BlockSpec((tb, ts), lambda b, s: (b, s)),    # mask tile
                pl.BlockSpec((V, D), lambda b, s: (0, 0)),      # emb table (resident)
                pl.BlockSpec((D, D), lambda b, s: (0, 0)),      # Wp (resident)
                pl.BlockSpec((1, D), lambda b, s: (0, 0)),      # bp
                pl.BlockSpec((D, CP), lambda b, s: (0, 0)),     # Wc (padded, resident)
                pl.BlockSpec((1, CP), lambda b, s: (0, 0)),     # bc (padded)
            ],
            out_specs=pl.BlockSpec((tb, CP), lambda b, s: (b, 0)),
            scratch_shapes=[
                pltpu.VMEM((tb, V), jnp.float32),   # masked vocab-histogram accumulator
                pltpu.VMEM((tb, 1), jnp.float32),   # mask-count accumulator
            ],
        ),
        compiler_params=pltpu.CompilerParams(
            dimension_semantics=("parallel", "arbitrary"),
            vmem_limit_bytes=_vmem_limit_bytes(),
        ),
    )(ids, mask, emb_table, wp, bp2, wc_pad, bc_pad)

    return out_padded[:, :C]


def init_params(key, vocab=64, embedding_dim=128, num_classes=8):
    k0, k1, k2, k3, k4 = jax.random.split(key, 5)
    scale = 0.02
    return {
        # Embedding table stored in bf16 (VMEM-resident inside the kernel).
        "embedding": (scale * jax.random.normal(
            k0, (vocab, embedding_dim), jnp.float32)).astype(jnp.bfloat16),
        "pooler_w": scale * jax.random.normal(
            k1, (embedding_dim, embedding_dim), jnp.float32),
        "pooler_b": scale * jax.random.normal(k2, (embedding_dim,), jnp.float32),
        # nn.Linear(embedding_dim, num_classes): stored (in, out) so kernel does x @ W + b.
        "cls_w": scale * jax.random.normal(
            k3, (embedding_dim, num_classes), jnp.float32),
        "cls_b": scale * jax.random.normal(k4, (num_classes,), jnp.float32),
    }


if __name__ == "__main__":
    key = jax.random.PRNGKey(0)
    kp, ki, kl = jax.random.split(key, 3)

    B, S = 16, 256
    VOCAB, D, C = 64, 128, 8

    params = init_params(kp, vocab=VOCAB, embedding_dim=D, num_classes=C)
    input_ids = jax.random.randint(ki, (B, S), 0, VOCAB, dtype=jnp.int32)

    # Variable-length sequences: valid tokens followed by padding.
    lengths = jax.random.randint(kl, (B,), 1, S + 1, dtype=jnp.int32)
    lengths = lengths.at[0].set(S)  # at least one fully-valid row
    attention_mask = (jnp.arange(S)[None, :] < lengths[:, None]).astype(jnp.int32)

    # tb=8, ts=128 -> grid (2, 2): exercises the parallel batch axis and the
    # multi-step seq reduction (pl.when init/finalize).  The auto-picker would
    # collapse this small problem to a single grid step.
    logits = embedding_classifier_forward(input_ids, attention_mask, params,
                                          tb=8, ts=128)
    jax.block_until_ready(logits)

    # Reference in plain JAX (same bf16 embedding table, f32 math).
    emb = jnp.take(params["embedding"], input_ids, axis=0).astype(jnp.float32)
    m = attention_mask.astype(jnp.float32)
    pooled = jnp.sum(emb * m[:, :, None], axis=1) / jnp.maximum(
        jnp.sum(m, axis=1, keepdims=True), 1.0)
    pooler = jnp.tanh(pooled @ params["pooler_w"] + params["pooler_b"])
    ref = pooler @ params["cls_w"] + params["cls_b"]

    assert logits.shape == (B, C), logits.shape
    assert jnp.allclose(logits, ref, atol=1e-4, rtol=1e-3), (
        float(jnp.max(jnp.abs(logits - ref))))

    print("KERNEL_OK")
</pallas_src>

<mosaic_0001>
module attributes {stable_mosaic.version = 11 : i64} {
  func.func @_classifier_kernel(%arg0: i32, %arg1: i32, %arg2: memref<8x128xi32, #tpu.memory_space<vmem>>, %arg3: memref<8x128xf32, #tpu.memory_space<vmem>>, %arg4: memref<64x128xbf16, #tpu.memory_space<vmem>>, %arg5: memref<128x128xf32, #tpu.memory_space<vmem>>, %arg6: memref<1x128xf32, #tpu.memory_space<vmem>>, %arg7: memref<128x128xf32, #tpu.memory_space<vmem>>, %arg8: memref<1x128xf32, #tpu.memory_space<vmem>>, %arg9: memref<8x128xf32, #tpu.memory_space<vmem>>, %arg10: memref<8x64xf32, #tpu.memory_space<vmem>>, %arg11: memref<8x1xf32, #tpu.memory_space<vmem>>) attributes {dimension_semantics = [#tpu.dimension_semantics<parallel>, #tpu.dimension_semantics<arbitrary>], iteration_bounds = array<i64: 2, 2>, scalar_prefetch = 0 : i64, scratch_operands = 2 : i64, tpu.core_type = #tpu.core_type<tc>, window_params = [{transform_indices = @transform_0, window_bounds = array<i64: 8, 128>}, {transform_indices = @transform_1, window_bounds = array<i64: 8, 128>}, {pipeline_mode = #tpu.pipeline_mode<synchronous>, transform_indices = @transform_2, window_bounds = array<i64: 64, 128>}, {pipeline_mode = #tpu.pipeline_mode<synchronous>, transform_indices = @transform_3, window_bounds = array<i64: 128, 128>}, {pipeline_mode = #tpu.pipeline_mode<synchronous>, transform_indices = @transform_4, window_bounds = array<i64: 1, 128>}, {pipeline_mode = #tpu.pipeline_mode<synchronous>, transform_indices = @transform_5, window_bounds = array<i64: 128, 128>}, {pipeline_mode = #tpu.pipeline_mode<synchronous>, transform_indices = @transform_6, window_bounds = array<i64: 1, 128>}, {transform_indices = @transform_7, window_bounds = array<i64: 8, 128>}]} {
    %c0_i32 = arith.constant 0 : i32
    %0 = arith.cmpi eq, %arg1, %c0_i32 : i32
    %1 = arith.extui %0 : i1 to i32
    %c0_i32_0 = arith.constant 0 : i32
    %2 = arith.cmpi ne, %1, %c0_i32_0 : i32
    scf.if %2 {
      %cst_14 = arith.constant 0.000000e+00 : f32
      %26 = vector.broadcast %cst_14 : f32 to vector<8x64xf32>
      %c0_15 = arith.constant 0 : index
      %c0_16 = arith.constant 0 : index
      %27 = vector.load %arg10[%c0_15, %c0_16] : memref<8x64xf32, #tpu.memory_space<vmem>>, vector<8x64xf32>
      tpu.vector_store %arg10[%c0_15, %c0_16], %26 {strides = array<i32>} : memref<8x64xf32, #tpu.memory_space<vmem>>, vector<8x64xf32>,
      %cst_17 = arith.constant 0.000000e+00 : f32
      %28 = vector.broadcast %cst_17 : f32 to vector<8x1xf32>
      %c0_18 = arith.constant 0 : index
      %c0_19 = arith.constant 0 : index
      %29 = vector.load %arg11[%c0_18, %c0_19] : memref<8x1xf32, #tpu.memory_space<vmem>>, vector<8x1xf32>
      tpu.vector_store %arg11[%c0_18, %c0_19], %28 {strides = array<i32>} : memref<8x1xf32, #tpu.memory_space<vmem>>, vector<8x1xf32>,
    } else {
    }
    %c0 = arith.constant 0 : index
    %c0_1 = arith.constant 0 : index
    %3 = vector.load %arg2[%c0, %c0_1] : memref<8x128xi32, #tpu.memory_space<vmem>>, vector<8x128xi32>
    %c0_2 = arith.constant 0 : index
    %c0_3 = arith.constant 0 : index
    %4 = vector.load %arg3[%c0_2, %c0_3] : memref<8x128xf32, #tpu.memory_space<vmem>>, vector<8x128xf32>
    %5 = tpu.iota {dimensions = array<i32: 2>} : vector<8x128x64xi32>
    %6 = vector.shape_cast %3 : vector<8x128xi32> to vector<8x128x1xi32>
    %7 = vector.broadcast %6 : vector<8x128x1xi32> to vector<8x128x64xi32>
    %8 = arith.cmpi eq, %7, %5 : vector<8x128x64xi32>
    %9 = arith.extui %8 : vector<8x128x64xi1> to vector<8x128x64xi32>
    %10 = arith.sitofp %9 : vector<8x128x64xi32> to vector<8x128x64xf32>
    %c0_4 = arith.constant 0 : index
    %c0_5 = arith.constant 0 : index
    %11 = vector.load %arg10[%c0_4, %c0_5] : memref<8x64xf32, #tpu.memory_space<vmem>>, vector<8x64xf32>
    %12 = vector.shape_cast %4 : vector<8x128xf32> to vector<8x128x1xf32>
    %13 = vector.broadcast %12 : vector<8x128x1xf32> to vector<8x128x64xf32>
    %14 = arith.mulf %10, %13 : vector<8x128x64xf32>
    %cst = arith.constant dense<0.000000e+00> : vector<8x64xf32>
    %15 = vector.multi_reduction <add>, %14, %cst [1] : vector<8x128x64xf32> to vector<8x64xf32>
    %16 = arith.addf %11, %15 : vector<8x64xf32>
    %c0_6 = arith.constant 0 : index
    %c0_7 = arith.constant 0 : index
    %17 = vector.load %arg10[%c0_6, %c0_7] : memref<8x64xf32, #tpu.memory_space<vmem>>, vector<8x64xf32>
    tpu.vector_store %arg10[%c0_6, %c0_7], %16 {strides = array<i32>} : memref<8x64xf32, #tpu.memory_space<vmem>>, vector<8x64xf32>,
    %c0_8 = arith.constant 0 : index
    %c0_9 = arith.constant 0 : index
    %18 = vector.load %arg11[%c0_8, %c0_9] : memref<8x1xf32, #tpu.memory_space<vmem>>, vector<8x1xf32>
    %cst_10 = arith.constant dense<0.000000e+00> : vector<8xf32>
    %19 = vector.multi_reduction <add>, %4, %cst_10 [1] : vector<8x128xf32> to vector<8xf32>
    %20 = vector.shape_cast %19 : vector<8xf32> to vector<8x1xf32>
    %21 = arith.addf %18, %20 : vector<8x1xf32>
    %c0_11 = arith.constant 0 : index
    %c0_12 = arith.constant 0 : index
    %22 = vector.load %arg11[%c0_11, %c0_12] : memref<8x1xf32, #tpu.memory_space<vmem>>, vector<8x1xf32>
    tpu.vector_store %arg11[%c0_11, %c0_12], %21 {strides = array<i32>} : memref<8x1xf32, #tpu.memory_space<vmem>>, vector<8x1xf32>,
    %c1_i32 = arith.constant 1 : i32
    %23 = arith.cmpi eq, %arg1, %c1_i32 : i32
    %24 = arith.extui %23 : i1 to i32
    %c0_i32_13 = arith.constant 0 : i32
    %25 = arith.cmpi ne, %24, %c0_i32_13 : i32
    scf.if %25 {
      %c0_14 = arith.constant 0 : index
      %c0_15 = arith.constant 0 : index
      %26 = vector.load %arg10[%c0_14, %c0_15] : memref<8x64xf32, #tpu.memory_space<vmem>>, vector<8x64xf32>
      %c0_16 = arith.constant 0 : index
      %c0_17 = arith.constant 0 : index
      %27 = vector.load %arg11[%c0_16, %c0_17] : memref<8x1xf32, #tpu.memory_space<vmem>>, vector<8x1xf32>
      %cst_18 = arith.constant 1.000000e+00 : f32
      %28 = vector.broadcast %cst_18 : f32 to vector<8x1xf32>
      %29 = arith.maximumf %27, %28 : vector<8x1xf32>
      %c0_19 = arith.constant 0 : index
      %c0_20 = arith.constant 0 : index
      %30 = vector.load %arg4[%c0_19, %c0_20] : memref<64x128xbf16, #tpu.memory_space<vmem>>, vector<64x128xbf16>
      %31 = arith.extf %30 : vector<64x128xbf16> to vector<64x128xf32>
      %cst_21 = arith.constant dense<0.000000e+00> : vector<8x128xf32>
      %32 = tpu.matmul %26, %31, %cst_21 {dimension_numbers = #tpu.dot_dimension_numbers<[1], [0], [0], [1], [0, 0, 1, 1], [], []>} : vector<8x64xf32>, vector<64x128xf32>, vector<8x128xf32> -> vector<8x128xf32>
      %33 = vector.broadcast %29 : vector<8x1xf32> to vector<8x128xf32>
      %34 = arith.divf %32, %33 : vector<8x128xf32>
      %c0_22 = arith.constant 0 : index
      %c0_23 = arith.constant 0 : index
      %35 = vector.load %arg5[%c0_22, %c0_23] : memref<128x128xf32, #tpu.memory_space<vmem>>, vector<128x128xf32>
      %cst_24 = arith.constant dense<0.000000e+00> : vector<8x128xf32>
      %36 = tpu.matmul %34, %35, %cst_24 {dimension_numbers = #tpu.dot_dimension_numbers<[1], [0], [0], [1], [0, 0, 1, 1], [], []>} : vector<8x128xf32>, vector<128x128xf32>, vector<8x128xf32> -> vector<8x128xf32>
      %c0_25 = arith.constant 0 : index
      %c0_26 = arith.constant 0 : index
      %37 = vector.load %arg6[%c0_25, %c0_26] : memref<1x128xf32, #tpu.memory_space<vmem>>, vector<1x128xf32>
      %38 = vector.broadcast %37 : vector<1x128xf32> to vector<8x128xf32>
      %39 = arith.addf %36, %38 : vector<8x128xf32>
      %40 = math.tanh %39 : vector<8x128xf32>
      %c0_27 = arith.constant 0 : index
      %c0_28 = arith.constant 0 : index
      %41 = vector.load %arg7[%c0_27, %c0_28] : memref<128x128xf32, #tpu.memory_space<vmem>>, vector<128x128xf32>
      %cst_29 = arith.constant dense<0.000000e+00> : vector<8x128xf32>
      %42 = tpu.matmul %40, %41, %cst_29 {dimension_numbers = #tpu.dot_dimension_numbers<[1], [0], [0], [1], [0, 0, 1, 1], [], []>} : vector<8x128xf32>, vector<128x128xf32>, vector<8x128xf32> -> vector<8x128xf32>
      %c0_30 = arith.constant 0 : index
      %c0_31 = arith.constant 0 : index
      %43 = vector.load %arg8[%c0_30, %c0_31] : memref<1x128xf32, #tpu.memory_space<vmem>>, vector<1x128xf32>
      %44 = vector.broadcast %43 : vector<1x128xf32> to vector<8x128xf32>
      %45 = arith.addf %42, %44 : vector<8x128xf32>
      %c0_32 = arith.constant 0 : index
      %c0_33 = arith.constant 0 : index
      %46 = vector.load %arg9[%c0_32, %c0_33] : memref<8x128xf32, #tpu.memory_space<vmem>>, vector<8x128xf32>
      tpu.vector_store %arg9[%c0_32, %c0_33], %45 {strides = array<i32>} : memref<8x128xf32, #tpu.memory_space<vmem>>, vector<8x128xf32>,
    } else {
    }
    return
  }
  func.func @transform_0(%arg0: i32, %arg1: i32) -> (i32, i32) {
    %c0_i32 = arith.constant 0 : i32
    return %arg0, %arg1 : i32, i32
  }
  func.func @transform_1(%arg0: i32, %arg1: i32) -> (i32, i32) {
    %c0_i32 = arith.constant 0 : i32
    return %arg0, %arg1 : i32, i32
  }
  func.func @transform_2(%arg0: i32, %arg1: i32) -> (i32, i32) {
    %c0_i32 = arith.constant 0 : i32
    %c0_i32_0 = arith.constant 0 : i32
    %c0_i32_1 = arith.constant 0 : i32
    return %c0_i32, %c0_i32_0 : i32, i32
  }
  func.func @transform_3(%arg0: i32, %arg1: i32) -> (i32, i32) {
    %c0_i32 = arith.constant 0 : i32
    %c0_i32_0 = arith.constant 0 : i32
    %c0_i32_1 = arith.constant 0 : i32
    return %c0_i32, %c0_i32_0 : i32, i32
  }
  func.func @transform_4(%arg0: i32, %arg1: i32) -> (i32, i32) {
    %c0_i32 = arith.constant 0 : i32
    %c0_i32_0 = arith.constant 0 : i32
    %c0_i32_1 = arith.constant 0 : i32
    return %c0_i32, %c0_i32_0 : i32, i32
  }
  func.func @transform_5(%arg0: i32, %arg1: i32) -> (i32, i32) {
    %c0_i32 = arith.constant 0 : i32
    %c0_i32_0 = arith.constant 0 : i32
    %c0_i32_1 = arith.constant 0 : i32
    return %c0_i32, %c0_i32_0 : i32, i32
  }
  func.func @transform_6(%arg0: i32, %arg1: i32) -> (i32, i32) {
    %c0_i32 = arith.constant 0 : i32
    %c0_i32_0 = arith.constant 0 : i32
    %c0_i32_1 = arith.constant 0 : i32
    return %c0_i32, %c0_i32_0 : i32, i32
  }
  func.func @transform_7(%arg0: i32, %arg1: i32) -> (i32, i32) {
    %c0_i32 = arith.constant 0 : i32
    %c0_i32_0 = arith.constant 0 : i32
    return %arg0, %c0_i32 : i32, i32
  }
}

</mosaic_0001>

<llo_original>
// kernel: tpu_custom_call.1
$region0: #{tpu_custom_call.1}
  #allocation0 [shape = 'u32[]', space=smem, size = 0x4, offset = 0x4, fixed_abs, tag = 'smem constant byte address 0x4 - core index']
  #allocation1 [shape = 'u32[72,128]{1,0:T(1,128)}', space=vmem, size = 0x9000, scoped, tag = 'internal scratch']
  #allocation2 [shape = 'f32[8,64]{1,0:T(8,128)}', space=vmem, size = 0x1000, scoped, tag = 'scratch operand']
  #allocation3 [shape = 'f32[8,1]{1,0:T(8,128)}', space=vmem, size = 0x1000, scoped, tag = 'scratch operand']
  %s0 = inlined_call_operand.hbm [shape: s32[16,256], index: 0, kind: input, shape index: {}]
  %s1 = inlined_call_operand.hbm [shape: f32[16,256], index: 1, kind: input, shape index: {}]
  %s2 = inlined_call_operand.hbm [shape: bf16[64,128], index: 2, kind: input, shape index: {}]
  %s3 = inlined_call_operand.hbm [shape: f32[128,128], index: 3, kind: input, shape index: {}]
  %s4 = inlined_call_operand.vmem [shape: f32[1,128], index: 4, kind: input, shape index: {}]
  %s5 = inlined_call_operand.hbm [shape: f32[128,128], index: 5, kind: input, shape index: {}]
  %s6 = inlined_call_operand.vmem [shape: f32[1,128], index: 6, kind: input, shape index: {}]
  %s7 = inlined_call_operand.hbm [shape: f32[16,128], index: 7, kind: output, shape index: {}]
  %s8 = sld [smem:[#allocation0]]
  $region89: #{tpu_custom_call.1} parent=0
    _
  %s10 = ssub.s32 1, %s8
  %s11 = scalar_select 0, %s10, %s8
  $region1: #{tpu_custom_call.1} parent=0
    #allocation4 [shape = 'u8[8192]{0}', space=vmem, size = 0x2000, scoped, tag = 'input window, operand 0']
    #allocation5 [shape = 's32[2]{0}', space=sflag, size = 0x8, scoped, tag = 'scoped memory for tpu_custom_call.1']
    #allocation6 [shape = 's32[2]{0}', space=sflag, size = 0x8, scoped, tag = 'scoped memory for tpu_custom_call.1']
    #allocation7 [shape = 'u8[8192]{0}', space=vmem, size = 0x2000, scoped, tag = 'input window, operand 1']
    #allocation8 [shape = 's32[2]{0}', space=sflag, size = 0x8, scoped, tag = 'scoped memory for tpu_custom_call.1']
    #allocation9 [shape = 'u8[16384]{0}', space=vmem, size = 0x4000, scoped, tag = 'input window, operand 2, single buffered']
    #allocation10 [shape = 'u8[65536]{0}', space=vmem, size = 0x10000, scoped, tag = 'input window, operand 3, single buffered']
    #allocation11 [shape = 's32[1]{0}', space=sflag, size = 0x4, scoped, tag = 'scoped memory for tpu_custom_call.1']
    #allocation12 [shape = 'u8[65536]{0}', space=vmem, size = 0x10000, scoped, tag = 'input window, operand 5, single buffered']
    #allocation13 [shape = 'u8[8192]{0}', space=vmem, size = 0x2000, scoped, tag = 'output window, operand 0']
    %12 = vsyncpa [#allocation5], 0
    %s13 = scalar_lea.sflag [#allocation5], 1
    %14 = vsyncpa %s13, 0
    %15 = vsyncpa [#allocation8], 0
    %s16 = scalar_lea.sflag [#allocation8], 1
    %17 = vsyncpa %s16, 0
    %18 = vsyncpa [#allocation11], 0
    %19 = vsyncpa [#allocation6], 0
    %s20 = scalar_lea.sflag [#allocation6], 1
    %21 = vsyncpa %s20, 0
    loop: start=0, step=1, limit=6
    $region2: #{tpu_custom_call.1} parent=1 // loop_pre_header
      _
    $region3: #{tpu_custom_call.1} parent=1 // loop_header
      %s23 = sphi 0, %s27
      %p24 = scmp.ge.s32.totalorder %s23, 6
      %s30 = sphi 0, %s42
      %s31 = sphi 0, %s38
      %s32 = sphi 0, %s30
      %s33 = sphi 0, %s31
      %s34 = sphi 0, %s32
      %s35 = sphi 0, %s33
      %s47 = sphi 0, %s49
      %s50 = sphi 0, %s47
      %s51 = sphi 0, %s50
      %s67 = sphi 0, %s51
      %s75 = sphi 0, %s77
      %s78 = sphi 0, %s75
      %s79 = sphi 0, %s78
      %s95 = sphi 0, %s79
      %s99 = sphi 0, %s99
      %s101 = sphi 0, %s99
      %s102 = sphi 0, %s101
      %s116 = sphi 0, %s102
      %s120 = sphi 0, %s120
      %s122 = sphi 0, %s120
      %s123 = sphi 0, %s122
      %s137 = sphi 0, %s123
      %s141 = sphi 0, %s141
      %s143 = sphi 0, %s141
      %s144 = sphi 0, %s143
      %s158 = sphi 0, %s144
      %s162 = sphi 0, %s162
      %s164 = sphi 0, %s162
      %s165 = sphi 0, %s164
      %s179 = sphi 0, %s165
      %s183 = sphi 0, %s183
      %s185 = sphi 0, %s183
      %s186 = sphi 0, %s185
      %s200 = sphi 0, %s186
      %s206 = sphi 0, %s208
      %s209 = sphi 0, %s206
      %s210 = sphi 0, %s209
      %s226 = sphi 0, %s210
    $region4: #{tpu_custom_call.1} parent=1 // loop_header_branch
      %26 = sbr.rel (%p24) target = $region8
    $region5: #{tpu_custom_call.1} parent=1 // loop_body
      %s28 = ssub.s32 %s23, 1
      %s29 = ssub.s32 %s23, 2
      %s36 = sadd.s32 1, %s31
      %p37 = scmp.ge.s32.totalorder %s36, 2
      %s38 = scalar_select %p37, 0, %s36
      %s39 = sadd.s32 1, %s30
      %s40 = scalar_select %p37, %s39, %s30
      %p41 = scmp.ge.s32.totalorder %s40, 2
      %s42 = scalar_select %p41, 0, %s40
      %s43 = ssub.s32 %s30, %s42
      %s44 = ssub.s32 %s31, %s38
      %s45 = sor.u32 %s43, %s44
      %p46 = scmp.eq.s32.totalorder %s45, 0
      %s48 = sadd.s32 %s47, 1
      %s49 = scalar_select %p46, %s47, %s48
      %p52 = pneg %p46
      %p53 = scmp.eq.s32.totalorder %s23, 3
      %p54 = por %p52, %p53
      %p55 = scmp.ne.s32.totalorder %s47, %s50
      %p56 = scmp.eq.s32.totalorder %s23, 0
      %p57 = por %p55, %p56
      %p58 = scmp.ne.s32.totalorder %s47, %s50
      %p59 = scmp.eq.s32.totalorder %s28, 3
      %p60 = por %p58, %p59
      %p61 = scmp.ne.s32.totalorder %s50, %s51
      %p62 = scmp.eq.s32.totalorder %s28, 0
      %p63 = por %p61, %p62
      %p64 = scmp.ne.s32.totalorder %s50, %s51
      %p65 = scmp.eq.s32.totalorder %s29, 3
      %p66 = por %p64, %p65
      %p68 = scmp.ne.s32.totalorder %s51, %s67
      %p69 = scmp.eq.s32.totalorder %s29, 0
      %p70 = por %p68, %p69
      %s71 = ssub.s32 %s30, %s42
      %s72 = ssub.s32 %s31, %s38
      %s73 = sor.u32 %s71, %s72
      %p74 = scmp.eq.s32.totalorder %s73, 0
      %s76 = sadd.s32 %s75, 1
      %s77 = scalar_select %p74, %s75, %s76
      %p80 = pneg %p74
      %p81 = scmp.eq.s32.totalorder %s23, 3
      %p82 = por %p80, %p81
      %p83 = scmp.ne.s32.totalorder %s75, %s78
      %p84 = scmp.eq.s32.totalorder %s23, 0
      %p85 = por %p83, %p84
      %p86 = scmp.ne.s32.totalorder %s75, %s78
      %p87 = scmp.eq.s32.totalorder %s28, 3
      %p88 = por %p86, %p87
      %p89 = scmp.ne.s32.totalorder %s78, %s79
      %p90 = scmp.eq.s32.totalorder %s28, 0
      %p91 = por %p89, %p90
      %p92 = scmp.ne.s32.totalorder %s78, %s79
      %p93 = scmp.eq.s32.totalorder %s29, 3
      %p94 = por %p92, %p93
      %p96 = scmp.ne.s32.totalorder %s79, %s95
      %p97 = scmp.eq.s32.totalorder %s29, 0
      %p98 = por %p96, %p97
      %s100 = sadd.s32 %s99, 1
      %p103 = scmp.eq.s32.totalorder %s23, 3
      %p104 = scmp.ne.s32.totalorder %s99, %s101
      %p105 = scmp.eq.s32.totalorder %s23, 0
      %p106 = por %p104, %p105
      %p107 = scmp.ne.s32.totalorder %s99, %s101
      %p108 = scmp.eq.s32.totalorder %s28, 3
      %p109 = por %p107, %p108
      %p110 = scmp.ne.s32.totalorder %s101, %s102
      %p111 = scmp.eq.s32.totalorder %s28, 0
      %p112 = por %p110, %p111
      %p113 = scmp.ne.s32.totalorder %s101, %s102
      %p114 = scmp.eq.s32.totalorder %s29, 3
      %p115 = por %p113, %p114
      %p117 = scmp.ne.s32.totalorder %s102, %s116
      %p118 = scmp.eq.s32.totalorder %s29, 0
      %p119 = por %p117, %p118
      %s121 = sadd.s32 %s120, 1
      %p124 = scmp.eq.s32.totalorder %s23, 3
      %p125 = scmp.ne.s32.totalorder %s120, %s122
      %p126 = scmp.eq.s32.totalorder %s23, 0
      %p127 = por %p125, %p126
      %p128 = scmp.ne.s32.totalorder %s120, %s122
      %p129 = scmp.eq.s32.totalorder %s28, 3
      %p130 = por %p128, %p129
      %p131 = scmp.ne.s32.totalorder %s122, %s123
      %p132 = scmp.eq.s32.totalorder %s28, 0
      %p133 = por %p131, %p132
      %p134 = scmp.ne.s32.totalorder %s122, %s123
      %p135 = scmp.eq.s32.totalorder %s29, 3
      %p136 = por %p134, %p135
      %p138 = scmp.ne.s32.totalorder %s123, %s137
      %p139 = scmp.eq.s32.totalorder %s29, 0
      %p140 = por %p138, %p139
      %s142 = sadd.s32 %s141, 1
      %p145 = scmp.eq.s32.totalorder %s23, 3
      %p146 = scmp.ne.s32.totalorder %s141, %s143
      %p147 = scmp.eq.s32.totalorder %s23, 0
      %p148 = por %p146, %p147
      %p149 = scmp.ne.s32.totalorder %s141, %s143
      %p150 = scmp.eq.s32.totalorder %s28, 3
      %p151 = por %p149, %p150
      %p152 = scmp.ne.s32.totalorder %s143, %s144
      %p153 = scmp.eq.s32.totalorder %s28, 0
      %p154 = por %p152, %p153
      %p155 = scmp.ne.s32.totalorder %s143, %s144
      %p156 = scmp.eq.s32.totalorder %s29, 3
      %p157 = por %p155, %p156
      %p159 = scmp.ne.s32.totalorder %s144, %s158
      %p160 = scmp.eq.s32.totalorder %s29, 0
      %p161 = por %p159, %p160
      %s163 = sadd.s32 %s162, 1
      %p166 = scmp.eq.s32.totalorder %s23, 3
      %p167 = scmp.ne.s32.totalorder %s162, %s164
      %p168 = scmp.eq.s32.totalorder %s23, 0
      %p169 = por %p167, %p168
      %p170 = scmp.ne.s32.totalorder %s162, %s164
      %p171 = scmp.eq.s32.totalorder %s28, 3
      %p172 = por %p170, %p171
      %p173 = scmp.ne.s32.totalorder %s164, %s165
      %p174 = scmp.eq.s32.totalorder %s28, 0
      %p175 = por %p173, %p174
      %p176 = scmp.ne.s32.totalorder %s164, %s165
      %p177 = scmp.eq.s32.totalorder %s29, 3
      %p178 = por %p176, %p177
      %p180 = scmp.ne.s32.totalorder %s165, %s179
      %p181 = scmp.eq.s32.totalorder %s29, 0
      %p182 = por %p180, %p181
      %s184 = sadd.s32 %s183, 1
      %p187 = scmp.eq.s32.totalorder %s23, 3
      %p188 = scmp.ne.s32.totalorder %s183, %s185
      %p189 = scmp.eq.s32.totalorder %s23, 0
      %p190 = por %p188, %p189
      %p191 = scmp.ne.s32.totalorder %s183, %s185
      %p192 = scmp.eq.s32.totalorder %s28, 3
      %p193 = por %p191, %p192
      %p194 = scmp.ne.s32.totalorder %s185, %s186
      %p195 = scmp.eq.s32.totalorder %s28, 0
      %p196 = por %p194, %p195
      %p197 = scmp.ne.s32.totalorder %s185, %s186
      %p198 = scmp.eq.s32.totalorder %s29, 3
      %p199 = por %p197, %p198
      %p201 = scmp.ne.s32.totalorder %s186, %s200
      %p202 = scmp.eq.s32.totalorder %s29, 0
      %p203 = por %p201, %p202
      %s204 = ssub.s32 %s30, %s42
      %p205 = scmp.eq.s32.totalorder %s204, 0
      %s207 = sadd.s32 %s206, 1
      %s208 = scalar_select %p205, %s206, %s207
      %p211 = pneg %p205
      %p212 = scmp.eq.s32.totalorder %s23, 3
      %p213 = por %p211, %p212
      %p214 = scmp.ne.s32.totalorder %s206, %s209
      %p215 = scmp.eq.s32.totalorder %s23, 0
      %p216 = por %p214, %p215
      %p217 = scmp.ne.s32.totalorder %s206, %s209
      %p218 = scmp.eq.s32.totalorder %s28, 3
      %p219 = por %p217, %p218
      %p220 = scmp.ne.s32.totalorder %s209, %s210
      %p221 = scmp.eq.s32.totalorder %s28, 0
      %p222 = por %p220, %p221
      %p223 = scmp.ne.s32.totalorder %s209, %s210
      %p224 = scmp.eq.s32.totalorder %s29, 3
      %p225 = por %p223, %p224
      %p227 = scmp.ne.s32.totalorder %s210, %s226
      %p228 = scmp.eq.s32.totalorder %s29, 0
      %p229 = por %p227, %p228
      %p230 = scmp.le.s32.totalorder 1, %s23
      %p231 = scmp.lt.s32.totalorder %s23, 5
      %p232 = pnand %p230, %p231
      %p233 = pneg %p232
      // Predicated region
      $region9: #{tpu_custom_call.1} parent=5 // pred_check
        _
      $region10: #{tpu_custom_call.1} parent=5 // pred_check_branch
        %235 = sbr.rel (%p232) target = $region12
      $region11: #{tpu_custom_call.1} parent=5 // pred_region
        %s236 = ssub.s32 %s23, 1
        // Predicated region
        $region13: #{tpu_custom_call.1} parent=11 // pred_check
          %p237 = pneg %p112
        $region14: #{tpu_custom_call.1} parent=11 // pred_check_branch
          %239 = sbr.rel (%p237) target = $region16
        $region15: #{tpu_custom_call.1} parent=11 // pred_region
          %241 = vsyncadd [#allocation8], 0
          %s242 = sshll.u32 %s2, 4
          %s243 = int_to_ptr.hbm [resolvable:$true] %s242
          %s244 = sshll.u32 [#allocation9], 4
          %s245 = int_to_ptr.vmem [resolvable:$true] %s244
          %250 = dma.hbm_to_vmem [thread:$0]  %s243, 512, %s245, [#allocation8], 64, 64, 4
        $region16: #{tpu_custom_call.1} parent=11 // pred_fallthru
          _
        // Predicated region
        $region17: #{tpu_custom_call.1} parent=11 // pred_check
          %p251 = pneg %p133
        $region18: #{tpu_custom_call.1} parent=11 // pred_check_branch
          %253 = sbr.rel (%p251) target = $region20
        $region19: #{tpu_custom_call.1} parent=11 // pred_region
          %255 = vsyncadd [#allocation11], 0
          %s256 = sshll.u32 %s3, 4
          %s257 = int_to_ptr.hbm [resolvable:$true] %s256
          %s258 = sshll.u32 [#allocation10], 4
          %s259 = int_to_ptr.vmem [resolvable:$true] %s258
          %264 = dma.hbm_to_vmem [thread:$0]  %s257, 2048, %s259, [#allocation11], 128, 128, 8
        $region20: #{tpu_custom_call.1} parent=11 // pred_fallthru
          _
        // Predicated region
        $region21: #{tpu_custom_call.1} parent=11 // pred_check
          %p265 = pneg %p154
        $region22: #{tpu_custom_call.1} parent=11 // pred_check_branch
          %267 = sbr.rel (%p265) target = $region24
        $region23: #{tpu_custom_call.1} parent=11 // pred_region
          _
        $region24: #{tpu_custom_call.1} parent=11 // pred_fallthru
          _
        // Predicated region
        $region25: #{tpu_custom_call.1} parent=11 // pred_check
          %p268 = pneg %p175
        $region26: #{tpu_custom_call.1} parent=11 // pred_check_branch
          %270 = sbr.rel (%p268) target = $region28
        $region27: #{tpu_custom_call.1} parent=11 // pred_region
          %272 = vsyncadd [#allocation11], 0
          %s273 = sshll.u32 %s5, 4
          %s274 = int_to_ptr.hbm [resolvable:$true] %s273
          %s275 = sshll.u32 [#allocation12], 4
          %s276 = int_to_ptr.vmem [resolvable:$true] %s275
          %281 = dma.hbm_to_vmem [thread:$0]  %s274, 2048, %s276, [#allocation11], 128, 128, 8
        $region28: #{tpu_custom_call.1} parent=11 // pred_fallthru
          _
        // Predicated region
        $region29: #{tpu_custom_call.1} parent=11 // pred_check
          %p282 = pneg %p196
        $region30: #{tpu_custom_call.1} parent=11 // pred_check_branch
          %284 = sbr.rel (%p282) target = $region32
        $region31: #{tpu_custom_call.1} parent=11 // pred_region
          _
        $region32: #{tpu_custom_call.1} parent=11 // pred_fallthru
          _
      $region12: #{tpu_custom_call.1} parent=5 // pred_fallthru
        _
      %p285 = scmp.lt.s32.totalorder %s23, 4
      // Predicated region
      $region33: #{tpu_custom_call.1} parent=5 // pred_check
        %p286 = pneg %p285
      $region34: #{tpu_custom_call.1} parent=5 // pred_check_branch
        %288 = sbr.rel (%p286) target = $region36
      $region35: #{tpu_custom_call.1} parent=5 // pred_region
        // Predicated region
        $region37: #{tpu_custom_call.1} parent=35 // pred_check
          %p289 = pneg %p57
        $region38: #{tpu_custom_call.1} parent=35 // pred_check_branch
          %291 = sbr.rel (%p289) target = $region40
        $region39: #{tpu_custom_call.1} parent=35 // pred_region
          %s292 = sand.u32 %s47, 1
          %s293 = scalar_lea.sflag [#allocation5], %s292
          %s294 = sand.u32 %s47, 1
          %s295 = smul.addr %s294, 8
          %s296 = scalar_lea.vmem [#allocation4], %s295
          %298 = vsyncadd %s293, 0
          %s299 = smul.addr %s30, 2
          %s300 = sadd.s32 %s31, %s299
          %s301 = smul.addr %s300, 8
          %s302 = scalar_lea.hbm %s0, %s301
          %s304 = sshll.u32 %s302, 4
          %s305 = int_to_ptr.hbm [resolvable:$true] %s304
          %s306 = sshll.u32 %s296, 4
          %s307 = int_to_ptr.vmem [resolvable:$true] %s306
          %309 = dma.hbm_to_vmem [thread:$0]  %s305, 128, %s307, %s293
        $region40: #{tpu_custom_call.1} parent=35 // pred_fallthru
          _
        // Predicated region
        $region41: #{tpu_custom_call.1} parent=35 // pred_check
          %p310 = pneg %p85
        $region42: #{tpu_custom_call.1} parent=35 // pred_check_branch
          %312 = sbr.rel (%p310) target = $region44
        $region43: #{tpu_custom_call.1} parent=35 // pred_region
          %s313 = sand.u32 %s23, 1
          %s314 = scalar_lea.sflag [#allocation8], %s313
          %s315 = sand.u32 %s75, 1
          %s316 = smul.addr %s315, 8
          %s317 = scalar_lea.vmem [#allocation7], %s316
          %319 = vsyncadd %s314, 0
          %s320 = smul.addr %s30, 2
          %s321 = sadd.s32 %s31, %s320
          %s322 = smul.addr %s321, 8
          %s323 = scalar_lea.hbm %s1, %s322
          %s325 = sshll.u32 %s323, 4
          %s326 = int_to_ptr.hbm [resolvable:$true] %s325
          %s327 = sshll.u32 %s317, 4
          %s328 = int_to_ptr.vmem [resolvable:$true] %s327
          %330 = dma.hbm_to_vmem [thread:$0]  %s326, 128, %s328, %s314
        $region44: #{tpu_custom_call.1} parent=35 // pred_fallthru
          _
      $region36: #{tpu_custom_call.1} parent=5 // pred_fallthru
        _
      %p331 = scmp.le.s32.totalorder 1, %s23
      %p332 = scmp.lt.s32.totalorder %s23, 5
      %p333 = pnand %p331, %p332
      %p334 = pneg %p333
      // Predicated region
      $region45: #{tpu_custom_call.1} parent=5 // pred_check
        _
      $region46: #{tpu_custom_call.1} parent=5 // pred_check_branch
        %336 = sbr.rel (%p333) target = $region48
      $region47: #{tpu_custom_call.1} parent=5 // pred_region
        %s337 = ssub.s32 %s23, 1
        %s338 = sand.u32 %s50, 1
        %s339 = scalar_lea.sflag [#allocation5], %s338
        %s340 = sand.u32 %s50, 1
        %s341 = smul.addr %s340, 8
        %s342 = scalar_lea.vmem [#allocation4], %s341
        // Predicated region
        $region49: #{tpu_custom_call.1} parent=47 // pred_check
          %p343 = pneg %p63
        $region50: #{tpu_custom_call.1} parent=47 // pred_check_branch
          %345 = sbr.rel (%p343) target = $region52
        $region51: #{tpu_custom_call.1} parent=47 // pred_region
          %347 = dma.done %s339, 128
        $region52: #{tpu_custom_call.1} parent=47 // pred_fallthru
          _
        %s348 = sand.u32 %s28, 1
        %s349 = scalar_lea.sflag [#allocation8], %s348
        %s350 = sand.u32 %s78, 1
        %s351 = smul.addr %s350, 8
        %s352 = scalar_lea.vmem [#allocation7], %s351
        // Predicated region
        $region53: #{tpu_custom_call.1} parent=47 // pred_check
          %p353 = pneg %p91
        $region54: #{tpu_custom_call.1} parent=47 // pred_check_branch
          %355 = sbr.rel (%p353) target = $region56
        $region55: #{tpu_custom_call.1} parent=47 // pred_region
          %357 = dma.done %s349, 128
        $region56: #{tpu_custom_call.1} parent=47 // pred_fallthru
          _
        // Predicated region
        $region57: #{tpu_custom_call.1} parent=47 // pred_check
          %p358 = pneg %p112
        $region58: #{tpu_custom_call.1} parent=47 // pred_check_branch
          %360 = sbr.rel (%p358) target = $region60
        $region59: #{tpu_custom_call.1} parent=47 // pred_region
          %362 = dma.done [#allocation8], 512
        $region60: #{tpu_custom_call.1} parent=47 // pred_fallthru
          _
        // Predicated region
        $region61: #{tpu_custom_call.1} parent=47 // pred_check
          %p363 = pneg %p133
        $region62: #{tpu_custom_call.1} parent=47 // pred_check_branch
          %365 = sbr.rel (%p363) target = $region64
        $region63: #{tpu_custom_call.1} parent=47 // pred_region
          %367 = dma.done [#allocation11], 2048
        $region64: #{tpu_custom_call.1} parent=47 // pred_fallthru
          _
        // Predicated region
        $region65: #{tpu_custom_call.1} parent=47 // pred_check
          %p368 = pneg %p175
        $region66: #{tpu_custom_call.1} parent=47 // pred_check_branch
          %370 = sbr.rel (%p368) target = $region68
        $region67: #{tpu_custom_call.1} parent=47 // pred_region
          %372 = dma.done [#allocation11], 2048
        $region68: #{tpu_custom_call.1} parent=47 // pred_fallthru
          _
        %s373 = sand.u32 %s50, 1
        %s374 = scalar_lea.sflag [#allocation5], %s373
        %s375 = sand.u32 %s50, 1
        %s376 = smul.addr %s375, 8
        %s377 = scalar_lea.vmem [#allocation4], %s376
        %p378 = pneg %p63
        %p379 = pneg %p60
        %s380 = sand.u32 %s28, 1
        %s381 = scalar_lea.sflag [#allocation8], %s380
        %s382 = sand.u32 %s78, 1
        %s383 = smul.addr %s382, 8
        %s384 = scalar_lea.vmem [#allocation7], %s383
        %p385 = pneg %p91
        %p386 = pneg %p88
        %p387 = pneg %p112
        %p388 = pneg %p109
        %p389 = pneg %p133
        %p390 = pneg %p130
        %p391 = pneg %p154
        %p392 = pneg %p151
        %p393 = pneg %p175
        %p394 = pneg %p172
        %p395 = pneg %p196
        %p396 = pneg %p193
        %p397 = pneg %p222
        %p398 = pneg %p219
        %s399 = sand.u32 %s209, 1
        %s400 = scalar_lea.sflag [#allocation6], %s399
        %s401 = sand.u32 %s209, 1
        %s402 = smul.addr %s401, 8
        %s403 = scalar_lea.vmem [#allocation13], %s402
        %p404 = scmp.eq.s32.totalorder %s33, 0
        // Predicated region
        $region69: #{tpu_custom_call.1} parent=47 // pred_check
          %p405 = pneg %p404
        $region70: #{tpu_custom_call.1} parent=47 // pred_check_branch
          %407 = sbr.rel (%p405) target = $region72
        $region71: #{tpu_custom_call.1} parent=47 // pred_region
          %vm408 = vcmask 523264
          %409 = vst.msk [vmem:[#allocation2] sm:$0xff] %vm408, 0.0
          %vm410 = vcmask 7168
          %411 = vst.msk [vmem:[#allocation3] sm:$0xff] %vm410, 0.0
        $region72: #{tpu_custom_call.1} parent=47 // pred_fallthru
          _
        %v412 = vld [vmem:[%s342] sm:$0xff]
        %v413 = vld [vmem:[%s352] sm:$0xff]
        %v414 = vlaneseq
        %v415 = vand.u32 %v414, 127
        %v416 = vperm.slane %v412, 0
        %v417 = vlaneseq
        %v418 = vshrl.u32 %v417, 7
        %420 = vset.pattern.permute.xlu0 %v418
        %421 = vperm.xlu0 %420, %v416
        %v422 = vpop.permute.xlu0 %421
        %v423 = vlaneseq
        %v424 = vshrl.u32 %v423, 7
        %v425 = vadd.s32 %v424, 8
        %426 = vset.pattern.permute.xlu0 %v425
        %427 = vperm.xlu0 %426, %v416
        %v428 = vpop.permute.xlu0 %427
        %v429 = vlaneseq
        %v430 = vshrl.u32 %v429, 7
        %v431 = vadd.s32 %v430, 16
        %432 = vset.pattern.permute.xlu0 %v431
        %433 = vperm.xlu0 %432, %v416
        %v434 = vpop.permute.xlu0 %433
        %v435 = vlaneseq
        %v436 = vshrl.u32 %v435, 7
        %v437 = vadd.s32 %v436, 24
        %438 = vset.pattern.permute.xlu0 %v437
        %439 = vperm.xlu0 %438, %v416
        %v440 = vpop.permute.xlu0 %439
        %v441 = vlaneseq
        %v442 = vshrl.u32 %v441, 7
        %v443 = vadd.s32 %v442, 32
        %444 = vset.pattern.permute.xlu0 %v443
        %445 = vperm.xlu0 %444, %v416
        %v446 = vpop.permute.xlu0 %445
        %v447 = vlaneseq
        %v448 = vshrl.u32 %v447, 7
        %v449 = vadd.s32 %v448, 40
        %450 = vset.pattern.permute.xlu0 %v449
        %451 = vperm.xlu0 %450, %v416
        %v452 = vpop.permute.xlu0 %451
        %v453 = vlaneseq
        %v454 = vshrl.u32 %v453, 7
        %v455 = vadd.s32 %v454, 48
        %456 = vset.pattern.permute.xlu0 %v455
        %457 = vperm.xlu0 %456, %v416
        %v458 = vpop.permute.xlu0 %457
        %v459 = vlaneseq
        %v460 = vshrl.u32 %v459, 7
        %v461 = vadd.s32 %v460, 56
        %462 = vset.pattern.permute.xlu0 %v461
        %463 = vperm.xlu0 %462, %v416
        %v464 = vpop.permute.xlu0 %463
        %v465 = vlaneseq
        %v466 = vshrl.u32 %v465, 7
        %v467 = vadd.s32 %v466, 64
        %468 = vset.pattern.permute.xlu0 %v467
        %469 = vperm.xlu0 %468, %v416
        %v470 = vpop.permute.xlu0 %469
        %v471 = vlaneseq
        %v472 = vshrl.u32 %v471, 7
        %v473 = vadd.s32 %v472, 72
        %474 = vset.pattern.permute.xlu0 %v473
        %475 = vperm.xlu0 %474, %v416
        %v476 = vpop.permute.xlu0 %475
        %v477 = vlaneseq
        %v478 = vshrl.u32 %v477, 7
        %v479 = vadd.s32 %v478, 80
        %480 = vset.pattern.permute.xlu0 %v479
        %481 = vperm.xlu0 %480, %v416
        %v482 = vpop.permute.xlu0 %481
        %v483 = vlaneseq
        %v484 = vshrl.u32 %v483, 7
        %v485 = vadd.s32 %v484, 88
        %486 = vset.pattern.permute.xlu0 %v485
        %487 = vperm.xlu0 %486, %v416
        %v488 = vpop.permute.xlu0 %487
        %v489 = vlaneseq
        %v490 = vshrl.u32 %v489, 7
        %v491 = vadd.s32 %v490, 96
        %492 = vset.pattern.permute.xlu0 %v491
        %493 = vperm.xlu0 %492, %v416
        %v494 = vpop.permute.xlu0 %493
        %v495 = vlaneseq
        %v496 = vshrl.u32 %v495, 7
        %v497 = vadd.s32 %v496, 104
        %498 = vset.pattern.permute.xlu0 %v497
        %499 = vperm.xlu0 %498, %v416
        %v500 = vpop.permute.xlu0 %499
        %v501 = vlaneseq
        %v502 = vshrl.u32 %v501, 7
        %v503 = vadd.s32 %v502, 112
        %504 = vset.pattern.permute.xlu0 %v503
        %505 = vperm.xlu0 %504, %v416
        %v506 = vpop.permute.xlu0 %505
        %v507 = vlaneseq
        %v508 = vshrl.u32 %v507, 7
        %v509 = vadd.s32 %v508, 120
        %510 = vset.pattern.permute.xlu0 %v509
        %511 = vperm.xlu0 %510, %v416
        %v512 = vpop.permute.xlu0 %511
        %v513 = vperm.slane %v412, 1
        %v514 = vlaneseq
        %v515 = vshrl.u32 %v514, 7
        %517 = vset.pattern.permute.xlu0 %v515
        %518 = vperm.xlu0 %517, %v513
        %v519 = vpop.permute.xlu0 %518
        %v520 = vlaneseq
        %v521 = vshrl.u32 %v520, 7
        %v522 = vadd.s32 %v521, 8
        %523 = vset.pattern.permute.xlu0 %v522
        %524 = vperm.xlu0 %523, %v513
        %v525 = vpop.permute.xlu0 %524
        %v526 = vlaneseq
        %v527 = vshrl.u32 %v526, 7
        %v528 = vadd.s32 %v527, 16
        %529 = vset.pattern.permute.xlu0 %v528
        %530 = vperm.xlu0 %529, %v513
        %v531 = vpop.permute.xlu0 %530
        %v532 = vlaneseq
        %v533 = vshrl.u32 %v532, 7
        %v534 = vadd.s32 %v533, 24
        %535 = vset.pattern.permute.xlu0 %v534
        %536 = vperm.xlu0 %535, %v513
        %v537 = vpop.permute.xlu0 %536
        %v538 = vlaneseq
        %v539 = vshrl.u32 %v538, 7
        %v540 = vadd.s32 %v539, 32
        %541 = vset.pattern.permute.xlu0 %v540
        %542 = vperm.xlu0 %541, %v513
        %v543 = vpop.permute.xlu0 %542
        %v544 = vlaneseq
        %v545 = vshrl.u32 %v544, 7
        %v546 = vadd.s32 %v545, 40
        %547 = vset.pattern.permute.xlu0 %v546
        %548 = vperm.xlu0 %547, %v513
        %v549 = vpop.permute.xlu0 %548
        %v550 = vlaneseq
        %v551 = vshrl.u32 %v550, 7
        %v552 = vadd.s32 %v551, 48
        %553 = vset.pattern.permute.xlu0 %v552
        %554 = vperm.xlu0 %553, %v513
        %v555 = vpop.permute.xlu0 %554
        %v556 = vlaneseq
        %v557 = vshrl.u32 %v556, 7
        %v558 = vadd.s32 %v557, 56
        %559 = vset.pattern.permute.xlu0 %v558
        %560 = vperm.xlu0 %559, %v513
        %v561 = vpop.permute.xlu0 %560
        %v562 = vlaneseq
        %v563 = vshrl.u32 %v562, 7
        %v564 = vadd.s32 %v563, 64
        %565 = vset.pattern.permute.xlu0 %v564
        %566 = vperm.xlu0 %565, %v513
        %v567 = vpop.permute.xlu0 %566
        %v568 = vlaneseq
        %v569 = vshrl.u32 %v568, 7
        %v570 = vadd.s32 %v569, 72
        %571 = vset.pattern.permute.xlu0 %v570
        %572 = vperm.xlu0 %571, %v513
        %v573 = vpop.permute.xlu0 %572
        %v574 = vlaneseq
        %v575 = vshrl.u32 %v574, 7
        %v576 = vadd.s32 %v575, 80
        %577 = vset.pattern.permute.xlu0 %v576
        %578 = vperm.xlu0 %577, %v513
        %v579 = vpop.permute.xlu0 %578
        %v580 = vlaneseq
        %v581 = vshrl.u32 %v580, 7
        %v582 = vadd.s32 %v581, 88
        %583 = vset.pattern.permute.xlu0 %v582
        %584 = vperm.xlu0 %583, %v513
        %v585 = vpop.permute.xlu0 %584
        %v586 = vlaneseq
        %v587 = vshrl.u32 %v586, 7
        %v588 = vadd.s32 %v587, 96
        %589 = vset.pattern.permute.xlu0 %v588
        %590 = vperm.xlu0 %589, %v513
        %v591 = vpop.permute.xlu0 %590
        %v592 = vlaneseq
        %v593 = vshrl.u32 %v592, 7
        %v594 = vadd.s32 %v593, 104
        %595 = vset.pattern.permute.xlu0 %v594
        %596 = vperm.xlu0 %595, %v513
        %v597 = vpop.permute.xlu0 %596
        %v598 = vlaneseq
        %v599 = vshrl.u32 %v598, 7
        %v600 = vadd.s32 %v599, 112
        %601 = vset.pattern.permute.xlu0 %v600
        %602 = vperm.xlu0 %601, %v513
        %v603 = vpop.permute.xlu0 %602
        %v604 = vlaneseq
        %v605 = vshrl.u32 %v604, 7
        %v606 = vadd.s32 %v605, 120
        %607 = vset.pattern.permute.xlu0 %v606
        %608 = vperm.xlu0 %607, %v513
        %v609 = vpop.permute.xlu0 %608
        %v610 = vperm.slane %v412, 2
        %v611 = vlaneseq
        %v612 = vshrl.u32 %v611, 7
        %614 = vset.pattern.permute.xlu0 %v612
        %615 = vperm.xlu0 %614, %v610
        %v616 = vpop.permute.xlu0 %615
        %v617 = vlaneseq
        %v618 = vshrl.u32 %v617, 7
        %v619 = vadd.s32 %v618, 8
        %620 = vset.pattern.permute.xlu0 %v619
        %621 = vperm.xlu0 %620, %v610
        %v622 = vpop.permute.xlu0 %621
        %v623 = vlaneseq
        %v624 = vshrl.u32 %v623, 7
        %v625 = vadd.s32 %v624, 16
        %626 = vset.pattern.permute.xlu0 %v625
        %627 = vperm.xlu0 %626, %v610
        %v628 = vpop.permute.xlu0 %627
        %v629 = vlaneseq
        %v630 = vshrl.u32 %v629, 7
        %v631 = vadd.s32 %v630, 24
        %632 = vset.pattern.permute.xlu0 %v631
        %633 = vperm.xlu0 %632, %v610
        %v634 = vpop.permute.xlu0 %633
        %v635 = vlaneseq
        %v636 = vshrl.u32 %v635, 7
        %v637 = vadd.s32 %v636, 32
        %638 = vset.pattern.permute.xlu0 %v637
        %639 = vperm.xlu0 %638, %v610
        %v640 = vpop.permute.xlu0 %639
        %v641 = vlaneseq
        %v642 = vshrl.u32 %v641, 7
        %v643 = vadd.s32 %v642, 40
        %644 = vset.pattern.permute.xlu0 %v643
        %645 = vperm.xlu0 %644, %v610
        %v646 = vpop.permute.xlu0 %645
        %v647 = vlaneseq
        %v648 = vshrl.u32 %v647, 7
        %v649 = vadd.s32 %v648, 48
        %650 = vset.pattern.permute.xlu0 %v649
        %651 = vperm.xlu0 %650, %v610
        %v652 = vpop.permute.xlu0 %651
        %v653 = vlaneseq
        %v654 = vshrl.u32 %v653, 7
        %v655 = vadd.s32 %v654, 56
        %656 = vset.pattern.permute.xlu0 %v655
        %657 = vperm.xlu0 %656, %v610
        %v658 = vpop.permute.xlu0 %657
        %v659 = vlaneseq
        %v660 = vshrl.u32 %v659, 7
        %v661 = vadd.s32 %v660, 64
        %662 = vset.pattern.permute.xlu0 %v661
        %663 = vperm.xlu0 %662, %v610
        %v664 = vpop.permute.xlu0 %663
        %v665 = vlaneseq
        %v666 = vshrl.u32 %v665, 7
        %v667 = vadd.s32 %v666, 72
        %668 = vset.pattern.permute.xlu0 %v667
        %669 = vperm.xlu0 %668, %v610
        %v670 = vpop.permute.xlu0 %669
        %v671 = vlaneseq
        %v672 = vshrl.u32 %v671, 7
        %v673 = vadd.s32 %v672, 80
        %674 = vset.pattern.permute.xlu0 %v673
        %675 = vperm.xlu0 %674, %v610
        %v676 = vpop.permute.xlu0 %675
        %v677 = vlaneseq
        %v678 = vshrl.u32 %v677, 7
        %v679 = vadd.s32 %v678, 88
        %680 = vset.pattern.permute.xlu0 %v679
        %681 = vperm.xlu0 %680, %v610
        %v682 = vpop.permute.xlu0 %681
        %v683 = vlaneseq
        %v684 = vshrl.u32 %v683, 7
        %v685 = vadd.s32 %v684, 96
        %686 = vset.pattern.permute.xlu0 %v685
        %687 = vperm.xlu0 %686, %v610
        %v688 = vpop.permute.xlu0 %687
        %v689 = vlaneseq
        %v690 = vshrl.u32 %v689, 7
        %v691 = vadd.s32 %v690, 104
        %692 = vset.pattern.permute.xlu0 %v691
        %693 = vperm.xlu0 %692, %v610
        %v694 = vpop.permute.xlu0 %693
        %v695 = vlaneseq
        %v696 = vshrl.u32 %v695, 7
        %v697 = vadd.s32 %v696, 112
        %698 = vset.pattern.permute.xlu0 %v697
        %699 = vperm.xlu0 %698, %v610
        %v700 = vpop.permute.xlu0 %699
        %v701 = vlaneseq
        %v702 = vshrl.u32 %v701, 7
        %v703 = vadd.s32 %v702, 120
        %704 = vset.pattern.permute.xlu0 %v703
        %705 = vperm.xlu0 %704, %v610
        %v706 = vpop.permute.xlu0 %705
        %v707 = vperm.slane %v412, 3
        %v708 = vlaneseq
        %v709 = vshrl.u32 %v708, 7
        %711 = vset.pattern.permute.xlu0 %v709
        %712 = vperm.xlu0 %711, %v707
        %v713 = vpop.permute.xlu0 %712
        %v714 = vlaneseq
        %v715 = vshrl.u32 %v714, 7
        %v716 = vadd.s32 %v715, 8
        %717 = vset.pattern.permute.xlu0 %v716
        %718 = vperm.xlu0 %717, %v707
        %v719 = vpop.permute.xlu0 %718
        %v720 = vlaneseq
        %v721 = vshrl.u32 %v720, 7
        %v722 = vadd.s32 %v721, 16
        %723 = vset.pattern.permute.xlu0 %v722
        %724 = vperm.xlu0 %723, %v707
        %v725 = vpop.permute.xlu0 %724
        %v726 = vlaneseq
        %v727 = vshrl.u32 %v726, 7
        %v728 = vadd.s32 %v727, 24
        %729 = vset.pattern.permute.xlu0 %v728
        %730 = vperm.xlu0 %729, %v707
        %v731 = vpop.permute.xlu0 %730
        %v732 = vlaneseq
        %v733 = vshrl.u32 %v732, 7
        %v734 = vadd.s32 %v733, 32
        %735 = vset.pattern.permute.xlu0 %v734
        %736 = vperm.xlu0 %735, %v707
        %v737 = vpop.permute.xlu0 %736
        %v738 = vlaneseq
        %v739 = vshrl.u32 %v738, 7
        %v740 = vadd.s32 %v739, 40
        %741 = vset.pattern.permute.xlu0 %v740
        %742 = vperm.xlu0 %741, %v707
        %v743 = vpop.permute.xlu0 %742
        %v744 = vlaneseq
        %v745 = vshrl.u32 %v744, 7
        %v746 = vadd.s32 %v745, 48
        %747 = vset.pattern.permute.xlu0 %v746
        %748 = vperm.xlu0 %747, %v707
        %v749 = vpop.permute.xlu0 %748
        %v750 = vlaneseq
        %v751 = vshrl.u32 %v750, 7
        %v752 = vadd.s32 %v751, 56
        %753 = vset.pattern.permute.xlu0 %v752
        %754 = vperm.xlu0 %753, %v707
        %v755 = vpop.permute.xlu0 %754
        %v756 = vlaneseq
        %v757 = vshrl.u32 %v756, 7
        %v758 = vadd.s32 %v757, 64
        %759 = vset.pattern.permute.xlu0 %v758
        %760 = vperm.xlu0 %759, %v707
        %v761 = vpop.permute.xlu0 %760
        %v762 = vlaneseq
        %v763 = vshrl.u32 %v762, 7
        %v764 = vadd.s32 %v763, 72
        %765 = vset.pattern.permute.xlu0 %v764
        %766 = vperm.xlu0 %765, %v707
        %v767 = vpop.permute.xlu0 %766
        %v768 = vlaneseq
        %v769 = vshrl.u32 %v768, 7
        %v770 = vadd.s32 %v769, 80
        %771 = vset.pattern.permute.xlu0 %v770
        %772 = vperm.xlu0 %771, %v707
        %v773 = vpop.permute.xlu0 %772
        %v774 = vlaneseq
        %v775 = vshrl.u32 %v774, 7
        %v776 = vadd.s32 %v775, 88
        %777 = vset.pattern.permute.xlu0 %v776
        %778 = vperm.xlu0 %777, %v707
        %v779 = vpop.permute.xlu0 %778
        %v780 = vlaneseq
        %v781 = vshrl.u32 %v780, 7
        %v782 = vadd.s32 %v781, 96
        %783 = vset.pattern.permute.xlu0 %v782
        %784 = vperm.xlu0 %783, %v707
        %v785 = vpop.permute.xlu0 %784
        %v786 = vlaneseq
        %v787 = vshrl.u32 %v786, 7
        %v788 = vadd.s32 %v787, 104
        %789 = vset.pattern.permute.xlu0 %v788
        %790 = vperm.xlu0 %789, %v707
        %v791 = vpop.permute.xlu0 %790
        %v792 = vlaneseq
        %v793 = vshrl.u32 %v792, 7
        %v794 = vadd.s32 %v793, 112
        %795 = vset.pattern.permute.xlu0 %v794
        %796 = vperm.xlu0 %795, %v707
        %v797 = vpop.permute.xlu0 %796
        %v798 = vlaneseq
        %v799 = vshrl.u32 %v798, 7
        %v800 = vadd.s32 %v799, 120
        %801 = vset.pattern.permute.xlu0 %v800
        %802 = vperm.xlu0 %801, %v707
        %v803 = vpop.permute.xlu0 %802
        %v804 = vperm.slane %v412, 4
        %v805 = vlaneseq
        %v806 = vshrl.u32 %v805, 7
        %808 = vset.pattern.permute.xlu0 %v806
        %809 = vperm.xlu0 %808, %v804
        %v810 = vpop.permute.xlu0 %809
        %v811 = vlaneseq
        %v812 = vshrl.u32 %v811, 7
        %v813 = vadd.s32 %v812, 8
        %814 = vset.pattern.permute.xlu0 %v813
        %815 = vperm.xlu0 %814, %v804
        %v816 = vpop.permute.xlu0 %815
        %v817 = vlaneseq
        %v818 = vshrl.u32 %v817, 7
        %v819 = vadd.s32 %v818, 16
        %820 = vset.pattern.permute.xlu0 %v819
        %821 = vperm.xlu0 %820, %v804
        %v822 = vpop.permute.xlu0 %821
        %v823 = vlaneseq
        %v824 = vshrl.u32 %v823, 7
        %v825 = vadd.s32 %v824, 24
        %826 = vset.pattern.permute.xlu0 %v825
        %827 = vperm.xlu0 %826, %v804
        %v828 = vpop.permute.xlu0 %827
        %v829 = vlaneseq
        %v830 = vshrl.u32 %v829, 7
        %v831 = vadd.s32 %v830, 32
        %832 = vset.pattern.permute.xlu0 %v831
        %833 = vperm.xlu0 %832, %v804
        %v834 = vpop.permute.xlu0 %833
        %v835 = vlaneseq
        %v836 = vshrl.u32 %v835, 7
        %v837 = vadd.s32 %v836, 40
        %838 = vset.pattern.permute.xlu0 %v837
        %839 = vperm.xlu0 %838, %v804
        %v840 = vpop.permute.xlu0 %839
        %v841 = vlaneseq
        %v842 = vshrl.u32 %v841, 7
        %v843 = vadd.s32 %v842, 48
        %844 = vset.pattern.permute.xlu0 %v843
        %845 = vperm.xlu0 %844, %v804
        %v846 = vpop.permute.xlu0 %845
        %v847 = vlaneseq
        %v848 = vshrl.u32 %v847, 7
        %v849 = vadd.s32 %v848, 56
        %850 = vset.pattern.permute.xlu0 %v849
        %851 = vperm.xlu0 %850, %v804
        %v852 = vpop.permute.xlu0 %851
        %v853 = vlaneseq
        %v854 = vshrl.u32 %v853, 7
        %v855 = vadd.s32 %v854, 64
        %856 = vset.pattern.permute.xlu0 %v855
        %857 = vperm.xlu0 %856, %v804
        %v858 = vpop.permute.xlu0 %857
        %v859 = vlaneseq
        %v860 = vshrl.u32 %v859, 7
        %v861 = vadd.s32 %v860, 72
        %862 = vset.pattern.permute.xlu0 %v861
        %863 = vperm.xlu0 %862, %v804
        %v864 = vpop.permute.xlu0 %863
        %v865 = vlaneseq
        %v866 = vshrl.u32 %v865, 7
        %v867 = vadd.s32 %v866, 80
        %868 = vset.pattern.permute.xlu0 %v867
        %869 = vperm.xlu0 %868, %v804
        %v870 = vpop.permute.xlu0 %869
        %v871 = vlaneseq
        %v872 = vshrl.u32 %v871, 7
        %v873 = vadd.s32 %v872, 88
        %874 = vset.pattern.permute.xlu0 %v873
        %875 = vperm.xlu0 %874, %v804
        %v876 = vpop.permute.xlu0 %875
        %v877 = vlaneseq
        %v878 = vshrl.u32 %v877, 7
        %v879 = vadd.s32 %v878, 96
        %880 = vset.pattern.permute.xlu0 %v879
        %881 = vperm.xlu0 %880, %v804
        %v882 = vpop.permute.xlu0 %881
        %v883 = vlaneseq
        %v884 = vshrl.u32 %v883, 7
        %v885 = vadd.s32 %v884, 104
        %886 = vset.pattern.permute.xlu0 %v885
        %887 = vperm.xlu0 %886, %v804
        %v888 = vpop.permute.xlu0 %887
        %v889 = vlaneseq
        %v890 = vshrl.u32 %v889, 7
        %v891 = vadd.s32 %v890, 112
        %892 = vset.pattern.permute.xlu0 %v891
        %893 = vperm.xlu0 %892, %v804
        %v894 = vpop.permute.xlu0 %893
        %v895 = vlaneseq
        %v896 = vshrl.u32 %v895, 7
        %v897 = vadd.s32 %v896, 120
        %898 = vset.pattern.permute.xlu0 %v897
        %899 = vperm.xlu0 %898, %v804
        %v900 = vpop.permute.xlu0 %899
        %v901 = vperm.slane %v412, 5
        %v902 = vlaneseq
        %v903 = vshrl.u32 %v902, 7
        %905 = vset.pattern.permute.xlu0 %v903
        %906 = vperm.xlu0 %905, %v901
        %v907 = vpop.permute.xlu0 %906
        %v908 = vlaneseq
        %v909 = vshrl.u32 %v908, 7
        %v910 = vadd.s32 %v909, 8
        %911 = vset.pattern.permute.xlu0 %v910
        %912 = vperm.xlu0 %911, %v901
        %v913 = vpop.permute.xlu0 %912
        %v914 = vlaneseq
        %v915 = vshrl.u32 %v914, 7
        %v916 = vadd.s32 %v915, 16
        %917 = vset.pattern.permute.xlu0 %v916
        %918 = vperm.xlu0 %917, %v901
        %v919 = vpop.permute.xlu0 %918
        %v920 = vlaneseq
        %v921 = vshrl.u32 %v920, 7
        %v922 = vadd.s32 %v921, 24
        %923 = vset.pattern.permute.xlu0 %v922
        %924 = vperm.xlu0 %923, %v901
        %v925 = vpop.permute.xlu0 %924
        %v926 = vlaneseq
        %v927 = vshrl.u32 %v926, 7
        %v928 = vadd.s32 %v927, 32
        %929 = vset.pattern.permute.xlu0 %v928
        %930 = vperm.xlu0 %929, %v901
        %v931 = vpop.permute.xlu0 %930
        %v932 = vlaneseq
        %v933 = vshrl.u32 %v932, 7
        %v934 = vadd.s32 %v933, 40
        %935 = vset.pattern.permute.xlu0 %v934
        %936 = vperm.xlu0 %935, %v901
        %v937 = vpop.permute.xlu0 %936
        %v938 = vlaneseq
        %v939 = vshrl.u32 %v938, 7
        %v940 = vadd.s32 %v939, 48
        %941 = vset.pattern.permute.xlu0 %v940
        %942 = vperm.xlu0 %941, %v901
        %v943 = vpop.permute.xlu0 %942
        %v944 = vlaneseq
        %v945 = vshrl.u32 %v944, 7
        %v946 = vadd.s32 %v945, 56
        %947 = vset.pattern.permute.xlu0 %v946
        %948 = vperm.xlu0 %947, %v901
        %v949 = vpop.permute.xlu0 %948
        %v950 = vlaneseq
        %v951 = vshrl.u32 %v950, 7
        %v952 = vadd.s32 %v951, 64
        %953 = vset.pattern.permute.xlu0 %v952
        %954 = vperm.xlu0 %953, %v901
        %v955 = vpop.permute.xlu0 %954
        %v956 = vlaneseq
        %v957 = vshrl.u32 %v956, 7
        %v958 = vadd.s32 %v957, 72
        %959 = vset.pattern.permute.xlu0 %v958
        %960 = vperm.xlu0 %959, %v901
        %v961 = vpop.permute.xlu0 %960
        %v962 = vlaneseq
        %v963 = vshrl.u32 %v962, 7
        %v964 = vadd.s32 %v963, 80
        %965 = vset.pattern.permute.xlu0 %v964
        %966 = vperm.xlu0 %965, %v901
        %v967 = vpop.permute.xlu0 %966
        %v968 = vlaneseq
        %v969 = vshrl.u32 %v968, 7
        %v970 = vadd.s32 %v969, 88
        %971 = vset.pattern.permute.xlu0 %v970
        %972 = vperm.xlu0 %971, %v901
        %v973 = vpop.permute.xlu0 %972
        %v974 = vlaneseq
        %v975 = vshrl.u32 %v974, 7
        %v976 = vadd.s32 %v975, 96
        %977 = vset.pattern.permute.xlu0 %v976
        %978 = vperm.xlu0 %977, %v901
        %v979 = vpop.permute.xlu0 %978
        %v980 = vlaneseq
        %v981 = vshrl.u32 %v980, 7
        %v982 = vadd.s32 %v981, 104
        %983 = vset.pattern.permute.xlu0 %v982
        %984 = vperm.xlu0 %983, %v901
        %v985 = vpop.permute.xlu0 %984
        %v986 = vlaneseq
        %v987 = vshrl.u32 %v986, 7
        %v988 = vadd.s32 %v987, 112
        %989 = vset.pattern.permute.xlu0 %v988
        %990 = vperm.xlu0 %989, %v901
        %v991 = vpop.permute.xlu0 %990
        %v992 = vlaneseq
        %v993 = vshrl.u32 %v992, 7
        %v994 = vadd.s32 %v993, 120
        %995 = vset.pattern.permute.xlu0 %v994
        %996 = vperm.xlu0 %995, %v901
        %v997 = vpop.permute.xlu0 %996
        %v998 = vperm.slane %v412, 6
        %v999 = vlaneseq
        %v1000 = vshrl.u32 %v999, 7
        %1002 = vset.pattern.permute.xlu0 %v1000
        %1003 = vperm.xlu0 %1002, %v998
        %v1004 = vpop.permute.xlu0 %1003
        %v1005 = vlaneseq
        %v1006 = vshrl.u32 %v1005, 7
        %v1007 = vadd.s32 %v1006, 8
        %1008 = vset.pattern.permute.xlu0 %v1007
        %1009 = vperm.xlu0 %1008, %v998
        %v1010 = vpop.permute.xlu0 %1009
        %v1011 = vlaneseq
        %v1012 = vshrl.u32 %v1011, 7
        %v1013 = vadd.s32 %v1012, 16
        %1014 = vset.pattern.permute.xlu0 %v1013
        %1015 = vperm.xlu0 %1014, %v998
        %v1016 = vpop.permute.xlu0 %1015
        %v1017 = vlaneseq
        %v1018 = vshrl.u32 %v1017, 7
        %v1019 = vadd.s32 %v1018, 24
        %1020 = vset.pattern.permute.xlu0 %v1019
        %1021 = vperm.xlu0 %1020, %v998
        %v1022 = vpop.permute.xlu0 %1021
        %v1023 = vlaneseq
        %v1024 = vshrl.u32 %v1023, 7
        %v1025 = vadd.s32 %v1024, 32
        %1026 = vset.pattern.permute.xlu0 %v1025
        %1027 = vperm.xlu0 %1026, %v998
        %v1028 = vpop.permute.xlu0 %1027
        %v1029 = vlaneseq
        %v1030 = vshrl.u32 %v1029, 7
        %v1031 = vadd.s32 %v1030, 40
        %1032 = vset.pattern.permute.xlu0 %v1031
        %1033 = vperm.xlu0 %1032, %v998
        %v1034 = vpop.permute.xlu0 %1033
        %v1035 = vlaneseq
        %v1036 = vshrl.u32 %v1035, 7
        %v1037 = vadd.s32 %v1036, 48
        %1038 = vset.pattern.permute.xlu0 %v1037
        %1039 = vperm.xlu0 %1038, %v998
        %v1040 = vpop.permute.xlu0 %1039
        %v1041 = vlaneseq
        %v1042 = vshrl.u32 %v1041, 7
        %v1043 = vadd.s32 %v1042, 56
        %1044 = vset.pattern.permute.xlu0 %v1043
        %1045 = vperm.xlu0 %1044, %v998
        %v1046 = vpop.permute.xlu0 %1045
        %v1047 = vlaneseq
        %v1048 = vshrl.u32 %v1047, 7
        %v1049 = vadd.s32 %v1048, 64
        %1050 = vset.pattern.permute.xlu0 %v1049
        %1051 = vperm.xlu0 %1050, %v998
        %v1052 = vpop.permute.xlu0 %1051
        %v1053 = vlaneseq
        %v1054 = vshrl.u32 %v1053, 7
        %v1055 = vadd.s32 %v1054, 72
        %1056 = vset.pattern.permute.xlu0 %v1055
        %1057 = vperm.xlu0 %1056, %v998
        %v1058 = vpop.permute.xlu0 %1057
        %v1059 = vlaneseq
        %v1060 = vshrl.u32 %v1059, 7
        %v1061 = vadd.s32 %v1060, 80
        %1062 = vset.pattern.permute.xlu0 %v1061
        %1063 = vperm.xlu0 %1062, %v998
        %v1064 = vpop.permute.xlu0 %1063
        %v1065 = vlaneseq
        %v1066 = vshrl.u32 %v1065, 7
        %v1067 = vadd.s32 %v1066, 88
        %1068 = vset.pattern.permute.xlu0 %v1067
        %1069 = vperm.xlu0 %1068, %v998
        %v1070 = vpop.permute.xlu0 %1069
        %v1071 = vlaneseq
        %v1072 = vshrl.u32 %v1071, 7
        %v1073 = vadd.s32 %v1072, 96
        %1074 = vset.pattern.permute.xlu0 %v1073
        %1075 = vperm.xlu0 %1074, %v998
        %v1076 = vpop.permute.xlu0 %1075
        %v1077 = vlaneseq
        %v1078 = vshrl.u32 %v1077, 7
        %v1079 = vadd.s32 %v1078, 104
        %1080 = vset.pattern.permute.xlu0 %v1079
        %1081 = vperm.xlu0 %1080, %v998
        %v1082 = vpop.permute.xlu0 %1081
        %v1083 = vlaneseq
        %v1084 = vshrl.u32 %v1083, 7
        %v1085 = vadd.s32 %v1084, 112
        %1086 = vset.pattern.permute.xlu0 %v1085
        %1087 = vperm.xlu0 %1086, %v998
        %v1088 = vpop.permute.xlu0 %1087
        %v1089 = vlaneseq
        %v1090 = vshrl.u32 %v1089, 7
        %v1091 = vadd.s32 %v1090, 120
        %1092 = vset.pattern.permute.xlu0 %v1091
        %1093 = vperm.xlu0 %1092, %v998
        %v1094 = vpop.permute.xlu0 %1093
        %v1095 = vperm.slane %v412, 7
        %v1096 = vlaneseq
        %v1097 = vshrl.u32 %v1096, 7
        %1099 = vset.pattern.permute.xlu0 %v1097
        %1100 = vperm.xlu0 %1099, %v1095
        %v1101 = vpop.permute.xlu0 %1100
        %v1102 = vlaneseq
        %v1103 = vshrl.u32 %v1102, 7
        %v1104 = vadd.s32 %v1103, 8
        %1105 = vset.pattern.permute.xlu0 %v1104
        %1106 = vperm.xlu0 %1105, %v1095
        %v1107 = vpop.permute.xlu0 %1106
        %v1108 = vlaneseq
        %v1109 = vshrl.u32 %v1108, 7
        %v1110 = vadd.s32 %v1109, 16
        %1111 = vset.pattern.permute.xlu0 %v1110
        %1112 = vperm.xlu0 %1111, %v1095
        %v1113 = vpop.permute.xlu0 %1112
        %v1114 = vlaneseq
        %v1115 = vshrl.u32 %v1114, 7
        %v1116 = vadd.s32 %v1115, 24
        %1117 = vset.pattern.permute.xlu0 %v1116
        %1118 = vperm.xlu0 %1117, %v1095
        %v1119 = vpop.permute.xlu0 %1118
        %v1120 = vlaneseq
        %v1121 = vshrl.u32 %v1120, 7
        %v1122 = vadd.s32 %v1121, 32
        %1123 = vset.pattern.permute.xlu0 %v1122
        %1124 = vperm.xlu0 %1123, %v1095
        %v1125 = vpop.permute.xlu0 %1124
        %v1126 = vlaneseq
        %v1127 = vshrl.u32 %v1126, 7
        %v1128 = vadd.s32 %v1127, 40
        %1129 = vset.pattern.permute.xlu0 %v1128
        %1130 = vperm.xlu0 %1129, %v1095
        %v1131 = vpop.permute.xlu0 %1130
        %v1132 = vlaneseq
        %v1133 = vshrl.u32 %v1132, 7
        %v1134 = vadd.s32 %v1133, 48
        %1135 = vset.pattern.permute.xlu0 %v1134
        %1136 = vperm.xlu0 %1135, %v1095
        %v1137 = vpop.permute.xlu0 %1136
        %v1138 = vlaneseq
        %v1139 = vshrl.u32 %v1138, 7
        %v1140 = vadd.s32 %v1139, 56
        %1141 = vset.pattern.permute.xlu0 %v1140
        %1142 = vperm.xlu0 %1141, %v1095
        %v1143 = vpop.permute.xlu0 %1142
        %v1144 = vlaneseq
        %v1145 = vshrl.u32 %v1144, 7
        %v1146 = vadd.s32 %v1145, 64
        %1147 = vset.pattern.permute.xlu0 %v1146
        %1148 = vperm.xlu0 %1147, %v1095
        %v1149 = vpop.permute.xlu0 %1148
        %v1150 = vlaneseq
        %v1151 = vshrl.u32 %v1150, 7
        %v1152 = vadd.s32 %v1151, 72
        %1153 = vset.pattern.permute.xlu0 %v1152
        %1154 = vperm.xlu0 %1153, %v1095
        %v1155 = vpop.permute.xlu0 %1154
        %v1156 = vlaneseq
        %v1157 = vshrl.u32 %v1156, 7
        %v1158 = vadd.s32 %v1157, 80
        %1159 = vset.pattern.permute.xlu0 %v1158
        %1160 = vperm.xlu0 %1159, %v1095
        %v1161 = vpop.permute.xlu0 %1160
        %v1162 = vlaneseq
        %v1163 = vshrl.u32 %v1162, 7
        %v1164 = vadd.s32 %v1163, 88
        %1165 = vset.pattern.permute.xlu0 %v1164
        %1166 = vperm.xlu0 %1165, %v1095
        %v1167 = vpop.permute.xlu0 %1166
        %v1168 = vlaneseq
        %v1169 = vshrl.u32 %v1168, 7
        %v1170 = vadd.s32 %v1169, 96
        %1171 = vset.pattern.permute.xlu0 %v1170
        %1172 = vperm.xlu0 %1171, %v1095
        %v1173 = vpop.permute.xlu0 %1172
        %v1174 = vlaneseq
        %v1175 = vshrl.u32 %v1174, 7
        %v1176 = vadd.s32 %v1175, 104
        %1177 = vset.pattern.permute.xlu0 %v1176
        %1178 = vperm.xlu0 %1177, %v1095
        %v1179 = vpop.permute.xlu0 %1178
        %v1180 = vlaneseq
        %v1181 = vshrl.u32 %v1180, 7
        %v1182 = vadd.s32 %v1181, 112
        %1183 = vset.pattern.permute.xlu0 %v1182
        %1184 = vperm.xlu0 %1183, %v1095
        %v1185 = vpop.permute.xlu0 %1184
        %v1186 = vlaneseq
        %v1187 = vshrl.u32 %v1186, 7
        %v1188 = vadd.s32 %v1187, 120
        %1189 = vset.pattern.permute.xlu0 %v1188
        %1190 = vperm.xlu0 %1189, %v1095
        %v1191 = vpop.permute.xlu0 %1190
        %vm1192 = vcmp.eq.s32.totalorder %v422, %v415
        %vm1193 = vcmp.eq.s32.totalorder %v428, %v415
        %vm1194 = vcmp.eq.s32.totalorder %v434, %v415
        %vm1195 = vcmp.eq.s32.totalorder %v440, %v415
        %vm1196 = vcmp.eq.s32.totalorder %v446, %v415
        %vm1197 = vcmp.eq.s32.totalorder %v452, %v415
        %vm1198 = vcmp.eq.s32.totalorder %v458, %v415
        %vm1199 = vcmp.eq.s32.totalorder %v464, %v415
        %vm1200 = vcmp.eq.s32.totalorder %v470, %v415
        %vm1201 = vcmp.eq.s32.totalorder %v476, %v415
        %vm1202 = vcmp.eq.s32.totalorder %v482, %v415
        %vm1203 = vcmp.eq.s32.totalorder %v488, %v415
        %vm1204 = vcmp.eq.s32.totalorder %v494, %v415
        %vm1205 = vcmp.eq.s32.totalorder %v500, %v415
        %vm1206 = vcmp.eq.s32.totalorder %v506, %v415
        %vm1207 = vcmp.eq.s32.totalorder %v512, %v415
        %vm1208 = vcmp.eq.s32.totalorder %v519, %v415
        %vm1209 = vcmp.eq.s32.totalorder %v525, %v415
        %vm1210 = vcmp.eq.s32.totalorder %v531, %v415
        %vm1211 = vcmp.eq.s32.totalorder %v537, %v415
        %vm1212 = vcmp.eq.s32.totalorder %v543, %v415
        %vm1213 = vcmp.eq.s32.totalorder %v549, %v415
        %vm1214 = vcmp.eq.s32.totalorder %v555, %v415
        %vm1215 = vcmp.eq.s32.totalorder %v561, %v415
        %vm1216 = vcmp.eq.s32.totalorder %v567, %v415
        %vm1217 = vcmp.eq.s32.totalorder %v573, %v415
        %vm1218 = vcmp.eq.s32.totalorder %v579, %v415
        %vm1219 = vcmp.eq.s32.totalorder %v585, %v415
        %vm1220 = vcmp.eq.s32.totalorder %v591, %v415
        %vm1221 = vcmp.eq.s32.totalorder %v597, %v415
        %vm1222 = vcmp.eq.s32.totalorder %v603, %v415
        %vm1223 = vcmp.eq.s32.totalorder %v609, %v415
        %vm1224 = vcmp.eq.s32.totalorder %v616, %v415
        %vm1225 = vcmp.eq.s32.totalorder %v622, %v415
        %vm1226 = vcmp.eq.s32.totalorder %v628, %v415
        %vm1227 = vcmp.eq.s32.totalorder %v634, %v415
        %vm1228 = vcmp.eq.s32.totalorder %v640, %v415
        %vm1229 = vcmp.eq.s32.totalorder %v646, %v415
        %vm1230 = vcmp.eq.s32.totalorder %v652, %v415
        %vm1231 = vcmp.eq.s32.totalorder %v658, %v415
        %vm1232 = vcmp.eq.s32.totalorder %v664, %v415
        %vm1233 = vcmp.eq.s32.totalorder %v670, %v415
        %vm1234 = vcmp.eq.s32.totalorder %v676, %v415
        %vm1235 = vcmp.eq.s32.totalorder %v682, %v415
        %vm1236 = vcmp.eq.s32.totalorder %v688, %v415
        %vm1237 = vcmp.eq.s32.totalorder %v694, %v415
        %vm1238 = vcmp.eq.s32.totalorder %v700, %v415
        %vm1239 = vcmp.eq.s32.totalorder %v706, %v415
        %vm1240 = vcmp.eq.s32.totalorder %v713, %v415
        %vm1241 = vcmp.eq.s32.totalorder %v719, %v415
        %vm1242 = vcmp.eq.s32.totalorder %v725, %v415
        %vm1243 = vcmp.eq.s32.totalorder %v731, %v415
        %vm1244 = vcmp.eq.s32.totalorder %v737, %v415
        %vm1245 = vcmp.eq.s32.totalorder %v743, %v415
        %vm1246 = vcmp.eq.s32.totalorder %v749, %v415
        %vm1247 = vcmp.eq.s32.totalorder %v755, %v415
        %vm1248 = vcmp.eq.s32.totalorder %v761, %v415
        %vm1249 = vcmp.eq.s32.totalorder %v767, %v415
        %vm1250 = vcmp.eq.s32.totalorder %v773, %v415
        %vm1251 = vcmp.eq.s32.totalorder %v779, %v415
        %vm1252 = vcmp.eq.s32.totalorder %v785, %v415
        %vm1253 = vcmp.eq.s32.totalorder %v791, %v415
        %vm1254 = vcmp.eq.s32.totalorder %v797, %v415
        %vm1255 = vcmp.eq.s32.totalorder %v803, %v415
        %vm1256 = vcmp.eq.s32.totalorder %v810, %v415
        %vm1257 = vcmp.eq.s32.totalorder %v816, %v415
        %vm1258 = vcmp.eq.s32.totalorder %v822, %v415
        %vm1259 = vcmp.eq.s32.totalorder %v828, %v415
        %vm1260 = vcmp.eq.s32.totalorder %v834, %v415
        %vm1261 = vcmp.eq.s32.totalorder %v840, %v415
        %vm1262 = vcmp.eq.s32.totalorder %v846, %v415
        %vm1263 = vcmp.eq.s32.totalorder %v852, %v415
        %vm1264 = vcmp.eq.s32.totalorder %v858, %v415
        %vm1265 = vcmp.eq.s32.totalorder %v864, %v415
        %vm1266 = vcmp.eq.s32.totalorder %v870, %v415
        %vm1267 = vcmp.eq.s32.totalorder %v876, %v415
        %vm1268 = vcmp.eq.s32.totalorder %v882, %v415
        %vm1269 = vcmp.eq.s32.totalorder %v888, %v415
        %vm1270 = vcmp.eq.s32.totalorder %v894, %v415
        %vm1271 = vcmp.eq.s32.totalorder %v900, %v415
        %vm1272 = vcmp.eq.s32.totalorder %v907, %v415
        %vm1273 = vcmp.eq.s32.totalorder %v913, %v415
        %vm1274 = vcmp.eq.s32.totalorder %v919, %v415
        %vm1275 = vcmp.eq.s32.totalorder %v925, %v415
        %vm1276 = vcmp.eq.s32.totalorder %v931, %v415
        %vm1277 = vcmp.eq.s32.totalorder %v937, %v415
        %vm1278 = vcmp.eq.s32.totalorder %v943, %v415
        %vm1279 = vcmp.eq.s32.totalorder %v949, %v415
        %vm1280 = vcmp.eq.s32.totalorder %v955, %v415
        %vm1281 = vcmp.eq.s32.totalorder %v961, %v415
        %vm1282 = vcmp.eq.s32.totalorder %v967, %v415
        %vm1283 = vcmp.eq.s32.totalorder %v973, %v415
        %vm1284 = vcmp.eq.s32.totalorder %v979, %v415
        %vm1285 = vcmp.eq.s32.totalorder %v985, %v415
        %vm1286 = vcmp.eq.s32.totalorder %v991, %v415
        %vm1287 = vcmp.eq.s32.totalorder %v997, %v415
        %vm1288 = vcmp.eq.s32.totalorder %v1004, %v415
        %vm1289 = vcmp.eq.s32.totalorder %v1010, %v415
        %vm1290 = vcmp.eq.s32.totalorder %v1016, %v415
        %vm1291 = vcmp.eq.s32.totalorder %v1022, %v415
        %vm1292 = vcmp.eq.s32.totalorder %v1028, %v415
        %vm1293 = vcmp.eq.s32.totalorder %v1034, %v415
        %vm1294 = vcmp.eq.s32.totalorder %v1040, %v415
        %vm1295 = vcmp.eq.s32.totalorder %v1046, %v415
        %vm1296 = vcmp.eq.s32.totalorder %v1052, %v415
        %vm1297 = vcmp.eq.s32.totalorder %v1058, %v415
        %vm1298 = vcmp.eq.s32.totalorder %v1064, %v415
        %vm1299 = vcmp.eq.s32.totalorder %v1070, %v415
        %vm1300 = vcmp.eq.s32.totalorder %v1076, %v415
        %vm1301 = vcmp.eq.s32.totalorder %v1082, %v415
        %vm1302 = vcmp.eq.s32.totalorder %v1088, %v415
        %vm1303 = vcmp.eq.s32.totalorder %v1094, %v415
        %vm1304 = vcmp.eq.s32.totalorder %v1101, %v415
        %vm1305 = vcmp.eq.s32.totalorder %v1107, %v415
        %vm1306 = vcmp.eq.s32.totalorder %v1113, %v415
        %vm1307 = vcmp.eq.s32.totalorder %v1119, %v415
        %vm1308 = vcmp.eq.s32.totalorder %v1125, %v415
        %vm1309 = vcmp.eq.s32.totalorder %v1131, %v415
        %vm1310 = vcmp.eq.s32.totalorder %v1137, %v415
        %vm1311 = vcmp.eq.s32.totalorder %v1143, %v415
        %vm1312 = vcmp.eq.s32.totalorder %v1149, %v415
        %vm1313 = vcmp.eq.s32.totalorder %v1155, %v415
        %vm1314 = vcmp.eq.s32.totalorder %v1161, %v415
        %vm1315 = vcmp.eq.s32.totalorder %v1167, %v415
        %vm1316 = vcmp.eq.s32.totalorder %v1173, %v415
        %vm1317 = vcmp.eq.s32.totalorder %v1179, %v415
        %vm1318 = vcmp.eq.s32.totalorder %v1185, %v415
        %vm1319 = vcmp.eq.s32.totalorder %v1191, %v415
        %v1320 = vsel %vm1192, 1, 0
        %v1321 = vsel %vm1193, 1, 0
        %v1322 = vsel %vm1194, 1, 0
        %v1323 = vsel %vm1195, 1, 0
        %v1324 = vsel %vm1196, 1, 0
        %v1325 = vsel %vm1197, 1, 0
        %v1326 = vsel %vm1198, 1, 0
        %v1327 = vsel %vm1199, 1, 0
        %v1328 = vsel %vm1200, 1, 0
        %v1329 = vsel %vm1201, 1, 0
        %v1330 = vsel %vm1202, 1, 0
        %v1331 = vsel %vm1203, 1, 0
        %v1332 = vsel %vm1204, 1, 0
        %v1333 = vsel %vm1205, 1, 0
        %v1334 = vsel %vm1206, 1, 0
        %v1335 = vsel %vm1207, 1, 0
        %v1336 = vsel %vm1208, 1, 0
        %v1337 = vsel %vm1209, 1, 0
        %v1338 = vsel %vm1210, 1, 0
        %v1339 = vsel %vm1211, 1, 0
        %v1340 = vsel %vm1212, 1, 0
        %v1341 = vsel %vm1213, 1, 0
        %v1342 = vsel %vm1214, 1, 0
        %v1343 = vsel %vm1215, 1, 0
        %v1344 = vsel %vm1216, 1, 0
        %v1345 = vsel %vm1217, 1, 0
        %v1346 = vsel %vm1218, 1, 0
        %v1347 = vsel %vm1219, 1, 0
        %v1348 = vsel %vm1220, 1, 0
        %v1349 = vsel %vm1221, 1, 0
        %v1350 = vsel %vm1222, 1, 0
        %v1351 = vsel %vm1223, 1, 0
        %v1352 = vsel %vm1224, 1, 0
        %v1353 = vsel %vm1225, 1, 0
        %v1354 = vsel %vm1226, 1, 0
        %v1355 = vsel %vm1227, 1, 0
        %v1356 = vsel %vm1228, 1, 0
        %v1357 = vsel %vm1229, 1, 0
        %v1358 = vsel %vm1230, 1, 0
        %v1359 = vsel %vm1231, 1, 0
        %v1360 = vsel %vm1232, 1, 0
        %v1361 = vsel %vm1233, 1, 0
        %v1362 = vsel %vm1234, 1, 0
        %v1363 = vsel %vm1235, 1, 0
        %v1364 = vsel %vm1236, 1, 0
        %v1365 = vsel %vm1237, 1, 0
        %v1366 = vsel %vm1238, 1, 0
        %v1367 = vsel %vm1239, 1, 0
        %v1368 = vsel %vm1240, 1, 0
        %v1369 = vsel %vm1241, 1, 0
        %v1370 = vsel %vm1242, 1, 0
        %v1371 = vsel %vm1243, 1, 0
        %v1372 = vsel %vm1244, 1, 0
        %v1373 = vsel %vm1245, 1, 0
        %v1374 = vsel %vm1246, 1, 0
        %v1375 = vsel %vm1247, 1, 0
        %v1376 = vsel %vm1248, 1, 0
        %v1377 = vsel %vm1249, 1, 0
        %v1378 = vsel %vm1250, 1, 0
        %v1379 = vsel %vm1251, 1, 0
        %v1380 = vsel %vm1252, 1, 0
        %v1381 = vsel %vm1253, 1, 0
        %v1382 = vsel %vm1254, 1, 0
        %v1383 = vsel %vm1255, 1, 0
        %v1384 = vsel %vm1256, 1, 0
        %v1385 = vsel %vm1257, 1, 0
        %v1386 = vsel %vm1258, 1, 0
        %v1387 = vsel %vm1259, 1, 0
        %v1388 = vsel %vm1260, 1, 0
        %v1389 = vsel %vm1261, 1, 0
        %v1390 = vsel %vm1262, 1, 0
        %v1391 = vsel %vm1263, 1, 0
        %v1392 = vsel %vm1264, 1, 0
        %v1393 = vsel %vm1265, 1, 0
        %v1394 = vsel %vm1266, 1, 0
        %v1395 = vsel %vm1267, 1, 0
        %v1396 = vsel %vm1268, 1, 0
        %v1397 = vsel %vm1269, 1, 0
        %v1398 = vsel %vm1270, 1, 0
        %v1399 = vsel %vm1271, 1, 0
        %v1400 = vsel %vm1272, 1, 0
        %v1401 = vsel %vm1273, 1, 0
        %v1402 = vsel %vm1274, 1, 0
        %v1403 = vsel %vm1275, 1, 0
        %v1404 = vsel %vm1276, 1, 0
        %v1405 = vsel %vm1277, 1, 0
        %v1406 = vsel %vm1278, 1, 0
        %v1407 = vsel %vm1279, 1, 0
        %v1408 = vsel %vm1280, 1, 0
        %v1409 = vsel %vm1281, 1, 0
        %v1410 = vsel %vm1282, 1, 0
        %v1411 = vsel %vm1283, 1, 0
        %v1412 = vsel %vm1284, 1, 0
        %v1413 = vsel %vm1285, 1, 0
        %v1414 = vsel %vm1286, 1, 0
        %v1415 = vsel %vm1287, 1, 0
        %v1416 = vsel %vm1288, 1, 0
        %v1417 = vsel %vm1289, 1, 0
        %v1418 = vsel %vm1290, 1, 0
        %v1419 = vsel %vm1291, 1, 0
        %v1420 = vsel %vm1292, 1, 0
        %v1421 = vsel %vm1293, 1, 0
        %v1422 = vsel %vm1294, 1, 0
        %v1423 = vsel %vm1295, 1, 0
        %v1424 = vsel %vm1296, 1, 0
        %v1425 = vsel %vm1297, 1, 0
        %v1426 = vsel %vm1298, 1, 0
        %v1427 = vsel %vm1299, 1, 0
        %v1428 = vsel %vm1300, 1, 0
        %v1429 = vsel %vm1301, 1, 0
        %v1430 = vsel %vm1302, 1, 0
        %v1431 = vsel %vm1303, 1, 0
        %v1432 = vsel %vm1304, 1, 0
        %v1433 = vsel %vm1305, 1, 0
        %v1434 = vsel %vm1306, 1, 0
        %v1435 = vsel %vm1307, 1, 0
        %v1436 = vsel %vm1308, 1, 0
        %v1437 = vsel %vm1309, 1, 0
        %v1438 = vsel %vm1310, 1, 0
        %v1439 = vsel %vm1311, 1, 0
        %v1440 = vsel %vm1312, 1, 0
        %v1441 = vsel %vm1313, 1, 0
        %v1442 = vsel %vm1314, 1, 0
        %v1443 = vsel %vm1315, 1, 0
        %v1444 = vsel %vm1316, 1, 0
        %v1445 = vsel %vm1317, 1, 0
        %v1446 = vsel %vm1318, 1, 0
        %v1447 = vsel %vm1319, 1, 0
        %v1448 = vcvt.s32.f32 %v1320
        %v1449 = vcvt.s32.f32 %v1321
        %v1450 = vcvt.s32.f32 %v1322
        %v1451 = vcvt.s32.f32 %v1323
        %v1452 = vcvt.s32.f32 %v1324
        %v1453 = vcvt.s32.f32 %v1325
        %v1454 = vcvt.s32.f32 %v1326
        %v1455 = vcvt.s32.f32 %v1327
        %v1456 = vcvt.s32.f32 %v1328
        %v1457 = vcvt.s32.f32 %v1329
        %v1458 = vcvt.s32.f32 %v1330
        %v1459 = vcvt.s32.f32 %v1331
        %v1460 = vcvt.s32.f32 %v1332
        %v1461 = vcvt.s32.f32 %v1333
        %v1462 = vcvt.s32.f32 %v1334
        %v1463 = vcvt.s32.f32 %v1335
        %v1464 = vcvt.s32.f32 %v1336
        %v1465 = vcvt.s32.f32 %v1337
        %v1466 = vcvt.s32.f32 %v1338
        %v1467 = vcvt.s32.f32 %v1339
        %v1468 = vcvt.s32.f32 %v1340
        %v1469 = vcvt.s32.f32 %v1341
        %v1470 = vcvt.s32.f32 %v1342
        %v1471 = vcvt.s32.f32 %v1343
        %v1472 = vcvt.s32.f32 %v1344
        %v1473 = vcvt.s32.f32 %v1345
        %v1474 = vcvt.s32.f32 %v1346
        %v1475 = vcvt.s32.f32 %v1347
        %v1476 = vcvt.s32.f32 %v1348
        %v1477 = vcvt.s32.f32 %v1349
        %v1478 = vcvt.s32.f32 %v1350
        %v1479 = vcvt.s32.f32 %v1351
        %v1480 = vcvt.s32.f32 %v1352
        %v1481 = vcvt.s32.f32 %v1353
        %v1482 = vcvt.s32.f32 %v1354
        %v1483 = vcvt.s32.f32 %v1355
        %v1484 = vcvt.s32.f32 %v1356
        %v1485 = vcvt.s32.f32 %v1357
        %v1486 = vcvt.s32.f32 %v1358
        %v1487 = vcvt.s32.f32 %v1359
        %v1488 = vcvt.s32.f32 %v1360
        %v1489 = vcvt.s32.f32 %v1361
        %v1490 = vcvt.s32.f32 %v1362
        %v1491 = vcvt.s32.f32 %v1363
        %v1492 = vcvt.s32.f32 %v1364
        %v1493 = vcvt.s32.f32 %v1365
        %v1494 = vcvt.s32.f32 %v1366
        %v1495 = vcvt.s32.f32 %v1367
        %v1496 = vcvt.s32.f32 %v1368
        %v1497 = vcvt.s32.f32 %v1369
        %v1498 = vcvt.s32.f32 %v1370
        %v1499 = vcvt.s32.f32 %v1371
        %v1500 = vcvt.s32.f32 %v1372
        %v1501 = vcvt.s32.f32 %v1373
        %v1502 = vcvt.s32.f32 %v1374
        %v1503 = vcvt.s32.f32 %v1375
        %v1504 = vcvt.s32.f32 %v1376
        %v1505 = vcvt.s32.f32 %v1377
        %v1506 = vcvt.s32.f32 %v1378
        %v1507 = vcvt.s32.f32 %v1379
        %v1508 = vcvt.s32.f32 %v1380
        %v1509 = vcvt.s32.f32 %v1381
        %v1510 = vcvt.s32.f32 %v1382
        %v1511 = vcvt.s32.f32 %v1383
        %v1512 = vcvt.s32.f32 %v1384
        %v1513 = vcvt.s32.f32 %v1385
        %v1514 = vcvt.s32.f32 %v1386
        %v1515 = vcvt.s32.f32 %v1387
        %v1516 = vcvt.s32.f32 %v1388
        %v1517 = vcvt.s32.f32 %v1389
        %v1518 = vcvt.s32.f32 %v1390
        %v1519 = vcvt.s32.f32 %v1391
        %v1520 = vcvt.s32.f32 %v1392
        %v1521 = vcvt.s32.f32 %v1393
        %v1522 = vcvt.s32.f32 %v1394
        %v1523 = vcvt.s32.f32 %v1395
        %v1524 = vcvt.s32.f32 %v1396
        %v1525 = vcvt.s32.f32 %v1397
        %v1526 = vcvt.s32.f32 %v1398
        %v1527 = vcvt.s32.f32 %v1399
        %v1528 = vcvt.s32.f32 %v1400
        %v1529 = vcvt.s32.f32 %v1401
        %v1530 = vcvt.s32.f32 %v1402
        %v1531 = vcvt.s32.f32 %v1403
        %v1532 = vcvt.s32.f32 %v1404
        %v1533 = vcvt.s32.f32 %v1405
        %v1534 = vcvt.s32.f32 %v1406
        %v1535 = vcvt.s32.f32 %v1407
        %v1536 = vcvt.s32.f32 %v1408
        %v1537 = vcvt.s32.f32 %v1409
        %v1538 = vcvt.s32.f32 %v1410
        %v1539 = vcvt.s32.f32 %v1411
        %v1540 = vcvt.s32.f32 %v1412
        %v1541 = vcvt.s32.f32 %v1413
        %v1542 = vcvt.s32.f32 %v1414
        %v1543 = vcvt.s32.f32 %v1415
        %v1544 = vcvt.s32.f32 %v1416
        %v1545 = vcvt.s32.f32 %v1417
        %v1546 = vcvt.s32.f32 %v1418
        %v1547 = vcvt.s32.f32 %v1419
        %v1548 = vcvt.s32.f32 %v1420
        %v1549 = vcvt.s32.f32 %v1421
        %v1550 = vcvt.s32.f32 %v1422
        %v1551 = vcvt.s32.f32 %v1423
        %v1552 = vcvt.s32.f32 %v1424
        %v1553 = vcvt.s32.f32 %v1425
        %v1554 = vcvt.s32.f32 %v1426
        %v1555 = vcvt.s32.f32 %v1427
        %v1556 = vcvt.s32.f32 %v1428
        %v1557 = vcvt.s32.f32 %v1429
        %v1558 = vcvt.s32.f32 %v1430
        %v1559 = vcvt.s32.f32 %v1431
        %v1560 = vcvt.s32.f32 %v1432
        %v1561 = vcvt.s32.f32 %v1433
        %v1562 = vcvt.s32.f32 %v1434
        %v1563 = vcvt.s32.f32 %v1435
        %v1564 = vcvt.s32.f32 %v1436
        %v1565 = vcvt.s32.f32 %v1437
        %v1566 = vcvt.s32.f32 %v1438
        %v1567 = vcvt.s32.f32 %v1439
        %v1568 = vcvt.s32.f32 %v1440
        %v1569 = vcvt.s32.f32 %v1441
        %v1570 = vcvt.s32.f32 %v1442
        %v1571 = vcvt.s32.f32 %v1443
        %v1572 = vcvt.s32.f32 %v1444
        %v1573 = vcvt.s32.f32 %v1445
        %v1574 = vcvt.s32.f32 %v1446
        %v1575 = vcvt.s32.f32 %v1447
        %v1576 = vld [vmem:[#allocation2] sm:$0xff]
        %v1577 = vperm.slane %v413, 0
        %v1578 = vlaneseq
        %v1579 = vshrl.u32 %v1578, 7
        %1581 = vset.pattern.permute.xlu0 %v1579
        %1582 = vperm.xlu0 %1581, %v1577
        %v1583 = vpop.permute.xlu0 %1582
        %v1584 = vlaneseq
        %v1585 = vshrl.u32 %v1584, 7
        %v1586 = vadd.s32 %v1585, 8
        %1587 = vset.pattern.permute.xlu0 %v1586
        %1588 = vperm.xlu0 %1587, %v1577
        %v1589 = vpop.permute.xlu0 %1588
        %v1590 = vlaneseq
        %v1591 = vshrl.u32 %v1590, 7
        %v1592 = vadd.s32 %v1591, 16
        %1593 = vset.pattern.permute.xlu0 %v1592
        %1594 = vperm.xlu0 %1593, %v1577
        %v1595 = vpop.permute.xlu0 %1594
        %v1596 = vlaneseq
        %v1597 = vshrl.u32 %v1596, 7
        %v1598 = vadd.s32 %v1597, 24
        %1599 = vset.pattern.permute.xlu0 %v1598
        %1600 = vperm.xlu0 %1599, %v1577
        %v1601 = vpop.permute.xlu0 %1600
        %v1602 = vlaneseq
        %v1603 = vshrl.u32 %v1602, 7
        %v1604 = vadd.s32 %v1603, 32
        %1605 = vset.pattern.permute.xlu0 %v1604
        %1606 = vperm.xlu0 %1605, %v1577
        %v1607 = vpop.permute.xlu0 %1606
        %v1608 = vlaneseq
        %v1609 = vshrl.u32 %v1608, 7
        %v1610 = vadd.s32 %v1609, 40
        %1611 = vset.pattern.permute.xlu0 %v1610
        %1612 = vperm.xlu0 %1611, %v1577
        %v1613 = vpop.permute.xlu0 %1612
        %v1614 = vlaneseq
        %v1615 = vshrl.u32 %v1614, 7
        %v1616 = vadd.s32 %v1615, 48
        %1617 = vset.pattern.permute.xlu0 %v1616
        %1618 = vperm.xlu0 %1617, %v1577
        %v1619 = vpop.permute.xlu0 %1618
        %v1620 = vlaneseq
        %v1621 = vshrl.u32 %v1620, 7
        %v1622 = vadd.s32 %v1621, 56
        %1623 = vset.pattern.permute.xlu0 %v1622
        %1624 = vperm.xlu0 %1623, %v1577
        %v1625 = vpop.permute.xlu0 %1624
        %v1626 = vlaneseq
        %v1627 = vshrl.u32 %v1626, 7
        %v1628 = vadd.s32 %v1627, 64
        %1629 = vset.pattern.permute.xlu0 %v1628
        %1630 = vperm.xlu0 %1629, %v1577
        %v1631 = vpop.permute.xlu0 %1630
        %v1632 = vlaneseq
        %v1633 = vshrl.u32 %v1632, 7
        %v1634 = vadd.s32 %v1633, 72
        %1635 = vset.pattern.permute.xlu0 %v1634
        %1636 = vperm.xlu0 %1635, %v1577
        %v1637 = vpop.permute.xlu0 %1636
        %v1638 = vlaneseq
        %v1639 = vshrl.u32 %v1638, 7
        %v1640 = vadd.s32 %v1639, 80
        %1641 = vset.pattern.permute.xlu0 %v1640
        %1642 = vperm.xlu0 %1641, %v1577
        %v1643 = vpop.permute.xlu0 %1642
        %v1644 = vlaneseq
        %v1645 = vshrl.u32 %v1644, 7
        %v1646 = vadd.s32 %v1645, 88
        %1647 = vset.pattern.permute.xlu0 %v1646
        %1648 = vperm.xlu0 %1647, %v1577
        %v1649 = vpop.permute.xlu0 %1648
        %v1650 = vlaneseq
        %v1651 = vshrl.u32 %v1650, 7
        %v1652 = vadd.s32 %v1651, 96
        %1653 = vset.pattern.permute.xlu0 %v1652
        %1654 = vperm.xlu0 %1653, %v1577
        %v1655 = vpop.permute.xlu0 %1654
        %v1656 = vlaneseq
        %v1657 = vshrl.u32 %v1656, 7
        %v1658 = vadd.s32 %v1657, 104
        %1659 = vset.pattern.permute.xlu0 %v1658
        %1660 = vperm.xlu0 %1659, %v1577
        %v1661 = vpop.permute.xlu0 %1660
        %v1662 = vlaneseq
        %v1663 = vshrl.u32 %v1662, 7
        %v1664 = vadd.s32 %v1663, 112
        %1665 = vset.pattern.permute.xlu0 %v1664
        %1666 = vperm.xlu0 %1665, %v1577
        %v1667 = vpop.permute.xlu0 %1666
        %v1668 = vlaneseq
        %v1669 = vshrl.u32 %v1668, 7
        %v1670 = vadd.s32 %v1669, 120
        %1671 = vset.pattern.permute.xlu0 %v1670
        %1672 = vperm.xlu0 %1671, %v1577
        %v1673 = vpop.permute.xlu0 %1672
        %v1674 = vperm.slane %v413, 1
        %v1675 = vlaneseq
        %v1676 = vshrl.u32 %v1675, 7
        %1678 = vset.pattern.permute.xlu0 %v1676
        %1679 = vperm.xlu0 %1678, %v1674
        %v1680 = vpop.permute.xlu0 %1679
        %v1681 = vlaneseq
        %v1682 = vshrl.u32 %v1681, 7
        %v1683 = vadd.s32 %v1682, 8
        %1684 = vset.pattern.permute.xlu0 %v1683
        %1685 = vperm.xlu0 %1684, %v1674
        %v1686 = vpop.permute.xlu0 %1685
        %v1687 = vlaneseq
        %v1688 = vshrl.u32 %v1687, 7
        %v1689 = vadd.s32 %v1688, 16
        %1690 = vset.pattern.permute.xlu0 %v1689
        %1691 = vperm.xlu0 %1690, %v1674
        %v1692 = vpop.permute.xlu0 %1691
        %v1693 = vlaneseq
        %v1694 = vshrl.u32 %v1693, 7
        %v1695 = vadd.s32 %v1694, 24
        %1696 = vset.pattern.permute.xlu0 %v1695
        %1697 = vperm.xlu0 %1696, %v1674
        %v1698 = vpop.permute.xlu0 %1697
        %v1699 = vlaneseq
        %v1700 = vshrl.u32 %v1699, 7
        %v1701 = vadd.s32 %v1700, 32
        %1702 = vset.pattern.permute.xlu0 %v1701
        %1703 = vperm.xlu0 %1702, %v1674
        %v1704 = vpop.permute.xlu0 %1703
        %v1705 = vlaneseq
        %v1706 = vshrl.u32 %v1705, 7
        %v1707 = vadd.s32 %v1706, 40
        %1708 = vset.pattern.permute.xlu0 %v1707
        %1709 = vperm.xlu0 %1708, %v1674
        %v1710 = vpop.permute.xlu0 %1709
        %v1711 = vlaneseq
        %v1712 = vshrl.u32 %v1711, 7
        %v1713 = vadd.s32 %v1712, 48
        %1714 = vset.pattern.permute.xlu0 %v1713
        %1715 = vperm.xlu0 %1714, %v1674
        %v1716 = vpop.permute.xlu0 %1715
        %v1717 = vlaneseq
        %v1718 = vshrl.u32 %v1717, 7
        %v1719 = vadd.s32 %v1718, 56
        %1720 = vset.pattern.permute.xlu0 %v1719
        %1721 = vperm.xlu0 %1720, %v1674
        %v1722 = vpop.permute.xlu0 %1721
        %v1723 = vlaneseq
        %v1724 = vshrl.u32 %v1723, 7
        %v1725 = vadd.s32 %v1724, 64
        %1726 = vset.pattern.permute.xlu0 %v1725
        %1727 = vperm.xlu0 %1726, %v1674
        %v1728 = vpop.permute.xlu0 %1727
        %v1729 = vlaneseq
        %v1730 = vshrl.u32 %v1729, 7
        %v1731 = vadd.s32 %v1730, 72
        %1732 = vset.pattern.permute.xlu0 %v1731
        %1733 = vperm.xlu0 %1732, %v1674
        %v1734 = vpop.permute.xlu0 %1733
        %v1735 = vlaneseq
        %v1736 = vshrl.u32 %v1735, 7
        %v1737 = vadd.s32 %v1736, 80
        %1738 = vset.pattern.permute.xlu0 %v1737
        %1739 = vperm.xlu0 %1738, %v1674
        %v1740 = vpop.permute.xlu0 %1739
        %v1741 = vlaneseq
        %v1742 = vshrl.u32 %v1741, 7
        %v1743 = vadd.s32 %v1742, 88
        %1744 = vset.pattern.permute.xlu0 %v1743
        %1745 = vperm.xlu0 %1744, %v1674
        %v1746 = vpop.permute.xlu0 %1745
        %v1747 = vlaneseq
        %v1748 = vshrl.u32 %v1747, 7
        %v1749 = vadd.s32 %v1748, 96
        %1750 = vset.pattern.permute.xlu0 %v1749
        %1751 = vperm.xlu0 %1750, %v1674
        %v1752 = vpop.permute.xlu0 %1751
        %v1753 = vlaneseq
        %v1754 = vshrl.u32 %v1753, 7
        %v1755 = vadd.s32 %v1754, 104
        %1756 = vset.pattern.permute.xlu0 %v1755
        %1757 = vperm.xlu0 %1756, %v1674
        %v1758 = vpop.permute.xlu0 %1757
        %v1759 = vlaneseq
        %v1760 = vshrl.u32 %v1759, 7
        %v1761 = vadd.s32 %v1760, 112
        %1762 = vset.pattern.permute.xlu0 %v1761
        %1763 = vperm.xlu0 %1762, %v1674
        %v1764 = vpop.permute.xlu0 %1763
        %v1765 = vlaneseq
        %v1766 = vshrl.u32 %v1765, 7
        %v1767 = vadd.s32 %v1766, 120
        %1768 = vset.pattern.permute.xlu0 %v1767
        %1769 = vperm.xlu0 %1768, %v1674
        %v1770 = vpop.permute.xlu0 %1769
        %v1771 = vperm.slane %v413, 2
        %v1772 = vlaneseq
        %v1773 = vshrl.u32 %v1772, 7
        %1775 = vset.pattern.permute.xlu0 %v1773
        %1776 = vperm.xlu0 %1775, %v1771
        %v1777 = vpop.permute.xlu0 %1776
        %v1778 = vlaneseq
        %v1779 = vshrl.u32 %v1778, 7
        %v1780 = vadd.s32 %v1779, 8
        %1781 = vset.pattern.permute.xlu0 %v1780
        %1782 = vperm.xlu0 %1781, %v1771
        %v1783 = vpop.permute.xlu0 %1782
        %v1784 = vlaneseq
        %v1785 = vshrl.u32 %v1784, 7
        %v1786 = vadd.s32 %v1785, 16
        %1787 = vset.pattern.permute.xlu0 %v1786
        %1788 = vperm.xlu0 %1787, %v1771
        %v1789 = vpop.permute.xlu0 %1788
        %v1790 = vlaneseq
        %v1791 = vshrl.u32 %v1790, 7
        %v1792 = vadd.s32 %v1791, 24
        %1793 = vset.pattern.permute.xlu0 %v1792
        %1794 = vperm.xlu0 %1793, %v1771
        %v1795 = vpop.permute.xlu0 %1794
        %v1796 = vlaneseq
        %v1797 = vshrl.u32 %v1796, 7
        %v1798 = vadd.s32 %v1797, 32
        %1799 = vset.pattern.permute.xlu0 %v1798
        %1800 = vperm.xlu0 %1799, %v1771
        %v1801 = vpop.permute.xlu0 %1800
        %v1802 = vlaneseq
        %v1803 = vshrl.u32 %v1802, 7
        %v1804 = vadd.s32 %v1803, 40
        %1805 = vset.pattern.permute.xlu0 %v1804
        %1806 = vperm.xlu0 %1805, %v1771
        %v1807 = vpop.permute.xlu0 %1806
        %v1808 = vlaneseq
        %v1809 = vshrl.u32 %v1808, 7
        %v1810 = vadd.s32 %v1809, 48
        %1811 = vset.pattern.permute.xlu0 %v1810
        %1812 = vperm.xlu0 %1811, %v1771
        %v1813 = vpop.permute.xlu0 %1812
        %v1814 = vlaneseq
        %v1815 = vshrl.u32 %v1814, 7
        %v1816 = vadd.s32 %v1815, 56
        %1817 = vset.pattern.permute.xlu0 %v1816
        %1818 = vperm.xlu0 %1817, %v1771
        %v1819 = vpop.permute.xlu0 %1818
        %v1820 = vlaneseq
        %v1821 = vshrl.u32 %v1820, 7
        %v1822 = vadd.s32 %v1821, 64
        %1823 = vset.pattern.permute.xlu0 %v1822
        %1824 = vperm.xlu0 %1823, %v1771
        %v1825 = vpop.permute.xlu0 %1824
        %v1826 = vlaneseq
        %v1827 = vshrl.u32 %v1826, 7
        %v1828 = vadd.s32 %v1827, 72
        %1829 = vset.pattern.permute.xlu0 %v1828
        %1830 = vperm.xlu0 %1829, %v1771
        %v1831 = vpop.permute.xlu0 %1830
        %v1832 = vlaneseq
        %v1833 = vshrl.u32 %v1832, 7
        %v1834 = vadd.s32 %v1833, 80
        %1835 = vset.pattern.permute.xlu0 %v1834
        %1836 = vperm.xlu0 %1835, %v1771
        %v1837 = vpop.permute.xlu0 %1836
        %v1838 = vlaneseq
        %v1839 = vshrl.u32 %v1838, 7
        %v1840 = vadd.s32 %v1839, 88
        %1841 = vset.pattern.permute.xlu0 %v1840
        %1842 = vperm.xlu0 %1841, %v1771
        %v1843 = vpop.permute.xlu0 %1842
        %v1844 = vlaneseq
        %v1845 = vshrl.u32 %v1844, 7
        %v1846 = vadd.s32 %v1845, 96
        %1847 = vset.pattern.permute.xlu0 %v1846
        %1848 = vperm.xlu0 %1847, %v1771
        %v1849 = vpop.permute.xlu0 %1848
        %v1850 = vlaneseq
        %v1851 = vshrl.u32 %v1850, 7
        %v1852 = vadd.s32 %v1851, 104
        %1853 = vset.pattern.permute.xlu0 %v1852
        %1854 = vperm.xlu0 %1853, %v1771
        %v1855 = vpop.permute.xlu0 %1854
        %v1856 = vlaneseq
        %v1857 = vshrl.u32 %v1856, 7
        %v1858 = vadd.s32 %v1857, 112
        %1859 = vset.pattern.permute.xlu0 %v1858
        %1860 = vperm.xlu0 %1859, %v1771
        %v1861 = vpop.permute.xlu0 %1860
        %v1862 = vlaneseq
        %v1863 = vshrl.u32 %v1862, 7
        %v1864 = vadd.s32 %v1863, 120
        %1865 = vset.pattern.permute.xlu0 %v1864
        %1866 = vperm.xlu0 %1865, %v1771
        %v1867 = vpop.permute.xlu0 %1866
        %v1868 = vperm.slane %v413, 3
        %v1869 = vlaneseq
        %v1870 = vshrl.u32 %v1869, 7
        %1872 = vset.pattern.permute.xlu0 %v1870
        %1873 = vperm.xlu0 %1872, %v1868
        %v1874 = vpop.permute.xlu0 %1873
        %v1875 = vlaneseq
        %v1876 = vshrl.u32 %v1875, 7
        %v1877 = vadd.s32 %v1876, 8
        %1878 = vset.pattern.permute.xlu0 %v1877
        %1879 = vperm.xlu0 %1878, %v1868
        %v1880 = vpop.permute.xlu0 %1879
        %v1881 = vlaneseq
        %v1882 = vshrl.u32 %v1881, 7
        %v1883 = vadd.s32 %v1882, 16
        %1884 = vset.pattern.permute.xlu0 %v1883
        %1885 = vperm.xlu0 %1884, %v1868
        %v1886 = vpop.permute.xlu0 %1885
        %v1887 = vlaneseq
        %v1888 = vshrl.u32 %v1887, 7
        %v1889 = vadd.s32 %v1888, 24
        %1890 = vset.pattern.permute.xlu0 %v1889
        %1891 = vperm.xlu0 %1890, %v1868
        %v1892 = vpop.permute.xlu0 %1891
        %v1893 = vlaneseq
        %v1894 = vshrl.u32 %v1893, 7
        %v1895 = vadd.s32 %v1894, 32
        %1896 = vset.pattern.permute.xlu0 %v1895
        %1897 = vperm.xlu0 %1896, %v1868
        %v1898 = vpop.permute.xlu0 %1897
        %v1899 = vlaneseq
        %v1900 = vshrl.u32 %v1899, 7
        %v1901 = vadd.s32 %v1900, 40
        %1902 = vset.pattern.permute.xlu0 %v1901
        %1903 = vperm.xlu0 %1902, %v1868
        %v1904 = vpop.permute.xlu0 %1903
        %v1905 = vlaneseq
        %v1906 = vshrl.u32 %v1905, 7
        %v1907 = vadd.s32 %v1906, 48
        %1908 = vset.pattern.permute.xlu0 %v1907
        %1909 = vperm.xlu0 %1908, %v1868
        %v1910 = vpop.permute.xlu0 %1909
        %v1911 = vlaneseq
        %v1912 = vshrl.u32 %v1911, 7
        %v1913 = vadd.s32 %v1912, 56
        %1914 = vset.pattern.permute.xlu0 %v1913
        %1915 = vperm.xlu0 %1914, %v1868
        %v1916 = vpop.permute.xlu0 %1915
        %v1917 = vlaneseq
        %v1918 = vshrl.u32 %v1917, 7
        %v1919 = vadd.s32 %v1918, 64
        %1920 = vset.pattern.permute.xlu0 %v1919
        %1921 = vperm.xlu0 %1920, %v1868
        %v1922 = vpop.permute.xlu0 %1921
        %v1923 = vlaneseq
        %v1924 = vshrl.u32 %v1923, 7
        %v1925 = vadd.s32 %v1924, 72
        %1926 = vset.pattern.permute.xlu0 %v1925
        %1927 = vperm.xlu0 %1926, %v1868
        %v1928 = vpop.permute.xlu0 %1927
        %v1929 = vlaneseq
        %v1930 = vshrl.u32 %v1929, 7
        %v1931 = vadd.s32 %v1930, 80
        %1932 = vset.pattern.permute.xlu0 %v1931
        %1933 = vperm.xlu0 %1932, %v1868
        %v1934 = vpop.permute.xlu0 %1933
        %v1935 = vlaneseq
        %v1936 = vshrl.u32 %v1935, 7
        %v1937 = vadd.s32 %v1936, 88
        %1938 = vset.pattern.permute.xlu0 %v1937
        %1939 = vperm.xlu0 %1938, %v1868
        %v1940 = vpop.permute.xlu0 %1939
        %v1941 = vlaneseq
        %v1942 = vshrl.u32 %v1941, 7
        %v1943 = vadd.s32 %v1942, 96
        %1944 = vset.pattern.permute.xlu0 %v1943
        %1945 = vperm.xlu0 %1944, %v1868
        %v1946 = vpop.permute.xlu0 %1945
        %v1947 = vlaneseq
        %v1948 = vshrl.u32 %v1947, 7
        %v1949 = vadd.s32 %v1948, 104
        %1950 = vset.pattern.permute.xlu0 %v1949
        %1951 = vperm.xlu0 %1950, %v1868
        %v1952 = vpop.permute.xlu0 %1951
        %v1953 = vlaneseq
        %v1954 = vshrl.u32 %v1953, 7
        %v1955 = vadd.s32 %v1954, 112
        %1956 = vset.pattern.permute.xlu0 %v1955
        %1957 = vperm.xlu0 %1956, %v1868
        %v1958 = vpop.permute.xlu0 %1957
        %v1959 = vlaneseq
        %v1960 = vshrl.u32 %v1959, 7
        %v1961 = vadd.s32 %v1960, 120
        %1962 = vset.pattern.permute.xlu0 %v1961
        %1963 = vperm.xlu0 %1962, %v1868
        %v1964 = vpop.permute.xlu0 %1963
        %v1965 = vperm.slane %v413, 4
        %v1966 = vlaneseq
        %v1967 = vshrl.u32 %v1966, 7
        %1969 = vset.pattern.permute.xlu0 %v1967
        %1970 = vperm.xlu0 %1969, %v1965
        %v1971 = vpop.permute.xlu0 %1970
        %v1972 = vlaneseq
        %v1973 = vshrl.u32 %v1972, 7
        %v1974 = vadd.s32 %v1973, 8
        %1975 = vset.pattern.permute.xlu0 %v1974
        %1976 = vperm.xlu0 %1975, %v1965
        %v1977 = vpop.permute.xlu0 %1976
        %v1978 = vlaneseq
        %v1979 = vshrl.u32 %v1978, 7
        %v1980 = vadd.s32 %v1979, 16
        %1981 = vset.pattern.permute.xlu0 %v1980
        %1982 = vperm.xlu0 %1981, %v1965
        %v1983 = vpop.permute.xlu0 %1982
        %v1984 = vlaneseq
        %v1985 = vshrl.u32 %v1984, 7
        %v1986 = vadd.s32 %v1985, 24
        %1987 = vset.pattern.permute.xlu0 %v1986
        %1988 = vperm.xlu0 %1987, %v1965
        %v1989 = vpop.permute.xlu0 %1988
        %v1990 = vlaneseq
        %v1991 = vshrl.u32 %v1990, 7
        %v1992 = vadd.s32 %v1991, 32
        %1993 = vset.pattern.permute.xlu0 %v1992
        %1994 = vperm.xlu0 %1993, %v1965
        %v1995 = vpop.permute.xlu0 %1994
        %v1996 = vlaneseq
        %v1997 = vshrl.u32 %v1996, 7
        %v1998 = vadd.s32 %v1997, 40
        %1999 = vset.pattern.permute.xlu0 %v1998
        %2000 = vperm.xlu0 %1999, %v1965
        %v2001 = vpop.permute.xlu0 %2000
        %v2002 = vlaneseq
        %v2003 = vshrl.u32 %v2002, 7
        %v2004 = vadd.s32 %v2003, 48
        %2005 = vset.pattern.permute.xlu0 %v2004
        %2006 = vperm.xlu0 %2005, %v1965
        %v2007 = vpop.permute.xlu0 %2006
        %v2008 = vlaneseq
        %v2009 = vshrl.u32 %v2008, 7
        %v2010 = vadd.s32 %v2009, 56
        %2011 = vset.pattern.permute.xlu0 %v2010
        %2012 = vperm.xlu0 %2011, %v1965
        %v2013 = vpop.permute.xlu0 %2012
        %v2014 = vlaneseq
        %v2015 = vshrl.u32 %v2014, 7
        %v2016 = vadd.s32 %v2015, 64
        %2017 = vset.pattern.permute.xlu0 %v2016
        %2018 = vperm.xlu0 %2017, %v1965
        %v2019 = vpop.permute.xlu0 %2018
        %v2020 = vlaneseq
        %v2021 = vshrl.u32 %v2020, 7
        %v2022 = vadd.s32 %v2021, 72
        %2023 = vset.pattern.permute.xlu0 %v2022
        %2024 = vperm.xlu0 %2023, %v1965
        %v2025 = vpop.permute.xlu0 %2024
        %v2026 = vlaneseq
        %v2027 = vshrl.u32 %v2026, 7
        %v2028 = vadd.s32 %v2027, 80
        %2029 = vset.pattern.permute.xlu0 %v2028
        %2030 = vperm.xlu0 %2029, %v1965
        %v2031 = vpop.permute.xlu0 %2030
        %v2032 = vlaneseq
        %v2033 = vshrl.u32 %v2032, 7
        %v2034 = vadd.s32 %v2033, 88
        %2035 = vset.pattern.permute.xlu0 %v2034
        %2036 = vperm.xlu0 %2035, %v1965
        %v2037 = vpop.permute.xlu0 %2036
        %v2038 = vlaneseq
        %v2039 = vshrl.u32 %v2038, 7
        %v2040 = vadd.s32 %v2039, 96
        %2041 = vset.pattern.permute.xlu0 %v2040
        %2042 = vperm.xlu0 %2041, %v1965
        %v2043 = vpop.permute.xlu0 %2042
        %v2044 = vlaneseq
        %v2045 = vshrl.u32 %v2044, 7
        %v2046 = vadd.s32 %v2045, 104
        %2047 = vset.pattern.permute.xlu0 %v2046
        %2048 = vperm.xlu0 %2047, %v1965
        %v2049 = vpop.permute.xlu0 %2048
        %v2050 = vlaneseq
        %v2051 = vshrl.u32 %v2050, 7
        %v2052 = vadd.s32 %v2051, 112
        %2053 = vset.pattern.permute.xlu0 %v2052
        %2054 = vperm.xlu0 %2053, %v1965
        %v2055 = vpop.permute.xlu0 %2054
        %v2056 = vlaneseq
        %v2057 = vshrl.u32 %v2056, 7
        %v2058 = vadd.s32 %v2057, 120
        %2059 = vset.pattern.permute.xlu0 %v2058
        %2060 = vperm.xlu0 %2059, %v1965
        %v2061 = vpop.permute.xlu0 %2060
        %v2062 = vperm.slane %v413, 5
        %v2063 = vlaneseq
        %v2064 = vshrl.u32 %v2063, 7
        %2066 = vset.pattern.permute.xlu0 %v2064
        %2067 = vperm.xlu0 %2066, %v2062
        %v2068 = vpop.permute.xlu0 %2067
        %v2069 = vlaneseq
        %v2070 = vshrl.u32 %v2069, 7
        %v2071 = vadd.s32 %v2070, 8
        %2072 = vset.pattern.permute.xlu0 %v2071
        %2073 = vperm.xlu0 %2072, %v2062
        %v2074 = vpop.permute.xlu0 %2073
        %v2075 = vlaneseq
        %v2076 = vshrl.u32 %v2075, 7
        %v2077 = vadd.s32 %v2076, 16
        %2078 = vset.pattern.permute.xlu0 %v2077
        %2079 = vperm.xlu0 %2078, %v2062
        %v2080 = vpop.permute.xlu0 %2079
        %v2081 = vlaneseq
        %v2082 = vshrl.u32 %v2081, 7
        %v2083 = vadd.s32 %v2082, 24
        %2084 = vset.pattern.permute.xlu0 %v2083
        %2085 = vperm.xlu0 %2084, %v2062
        %v2086 = vpop.permute.xlu0 %2085
        %v2087 = vlaneseq
        %v2088 = vshrl.u32 %v2087, 7
        %v2089 = vadd.s32 %v2088, 32
        %2090 = vset.pattern.permute.xlu0 %v2089
        %2091 = vperm.xlu0 %2090, %v2062
        %v2092 = vpop.permute.xlu0 %2091
        %v2093 = vlaneseq
        %v2094 = vshrl.u32 %v2093, 7
        %v2095 = vadd.s32 %v2094, 40
        %2096 = vset.pattern.permute.xlu0 %v2095
        %2097 = vperm.xlu0 %2096, %v2062
        %v2098 = vpop.permute.xlu0 %2097
        %v2099 = vlaneseq
        %v2100 = vshrl.u32 %v2099, 7
        %v2101 = vadd.s32 %v2100, 48
        %2102 = vset.pattern.permute.xlu0 %v2101
        %2103 = vperm.xlu0 %2102, %v2062
        %v2104 = vpop.permute.xlu0 %2103
        %v2105 = vlaneseq
        %v2106 = vshrl.u32 %v2105, 7
        %v2107 = vadd.s32 %v2106, 56
        %2108 = vset.pattern.permute.xlu0 %v2107
        %2109 = vperm.xlu0 %2108, %v2062
        %v2110 = vpop.permute.xlu0 %2109
        %v2111 = vlaneseq
        %v2112 = vshrl.u32 %v2111, 7
        %v2113 = vadd.s32 %v2112, 64
        %2114 = vset.pattern.permute.xlu0 %v2113
        %2115 = vperm.xlu0 %2114, %v2062
        %v2116 = vpop.permute.xlu0 %2115
        %v2117 = vlaneseq
        %v2118 = vshrl.u32 %v2117, 7
        %v2119 = vadd.s32 %v2118, 72
        %2120 = vset.pattern.permute.xlu0 %v2119
        %2121 = vperm.xlu0 %2120, %v2062
        %v2122 = vpop.permute.xlu0 %2121
        %v2123 = vlaneseq
        %v2124 = vshrl.u32 %v2123, 7
        %v2125 = vadd.s32 %v2124, 80
        %2126 = vset.pattern.permute.xlu0 %v2125
        %2127 = vperm.xlu0 %2126, %v2062
        %v2128 = vpop.permute.xlu0 %2127
        %v2129 = vlaneseq
        %v2130 = vshrl.u32 %v2129, 7
        %v2131 = vadd.s32 %v2130, 88
        %2132 = vset.pattern.permute.xlu0 %v2131
        %2133 = vperm.xlu0 %2132, %v2062
        %v2134 = vpop.permute.xlu0 %2133
        %v2135 = vlaneseq
        %v2136 = vshrl.u32 %v2135, 7
        %v2137 = vadd.s32 %v2136, 96
        %2138 = vset.pattern.permute.xlu0 %v2137
        %2139 = vperm.xlu0 %2138, %v2062
        %v2140 = vpop.permute.xlu0 %2139
        %v2141 = vlaneseq
        %v2142 = vshrl.u32 %v2141, 7
        %v2143 = vadd.s32 %v2142, 104
        %2144 = vset.pattern.permute.xlu0 %v2143
        %2145 = vperm.xlu0 %2144, %v2062
        %v2146 = vpop.permute.xlu0 %2145
        %v2147 = vlaneseq
        %v2148 = vshrl.u32 %v2147, 7
        %v2149 = vadd.s32 %v2148, 112
        %2150 = vset.pattern.permute.xlu0 %v2149
        %2151 = vperm.xlu0 %2150, %v2062
        %v2152 = vpop.permute.xlu0 %2151
        %v2153 = vlaneseq
        %v2154 = vshrl.u32 %v2153, 7
        %v2155 = vadd.s32 %v2154, 120
        %2156 = vset.pattern.permute.xlu0 %v2155
        %2157 = vperm.xlu0 %2156, %v2062
        %v2158 = vpop.permute.xlu0 %2157
        %v2159 = vperm.slane %v413, 6
        %v2160 = vlaneseq
        %v2161 = vshrl.u32 %v2160, 7
        %2163 = vset.pattern.permute.xlu0 %v2161
        %2164 = vperm.xlu0 %2163, %v2159
        %v2165 = vpop.permute.xlu0 %2164
        %v2166 = vlaneseq
        %v2167 = vshrl.u32 %v2166, 7
        %v2168 = vadd.s32 %v2167, 8
        %2169 = vset.pattern.permute.xlu0 %v2168
        %2170 = vperm.xlu0 %2169, %v2159
        %v2171 = vpop.permute.xlu0 %2170
        %v2172 = vlaneseq
        %v2173 = vshrl.u32 %v2172, 7
        %v2174 = vadd.s32 %v2173, 16
        %2175 = vset.pattern.permute.xlu0 %v2174
        %2176 = vperm.xlu0 %2175, %v2159
        %v2177 = vpop.permute.xlu0 %2176
        %v2178 = vlaneseq
        %v2179 = vshrl.u32 %v2178, 7
        %v2180 = vadd.s32 %v2179, 24
        %2181 = vset.pattern.permute.xlu0 %v2180
        %2182 = vperm.xlu0 %2181, %v2159
        %v2183 = vpop.permute.xlu0 %2182
        %v2184 = vlaneseq
        %v2185 = vshrl.u32 %v2184, 7
        %v2186 = vadd.s32 %v2185, 32
        %2187 = vset.pattern.permute.xlu0 %v2186
        %2188 = vperm.xlu0 %2187, %v2159
        %v2189 = vpop.permute.xlu0 %2188
        %v2190 = vlaneseq
        %v2191 = vshrl.u32 %v2190, 7
        %v2192 = vadd.s32 %v2191, 40
        %2193 = vset.pattern.permute.xlu0 %v2192
        %2194 = vperm.xlu0 %2193, %v2159
        %v2195 = vpop.permute.xlu0 %2194
        %v2196 = vlaneseq
        %v2197 = vshrl.u32 %v2196, 7
        %v2198 = vadd.s32 %v2197, 48
        %2199 = vset.pattern.permute.xlu0 %v2198
        %2200 = vperm.xlu0 %2199, %v2159
        %v2201 = vpop.permute.xlu0 %2200
        %v2202 = vlaneseq
        %v2203 = vshrl.u32 %v2202, 7
        %v2204 = vadd.s32 %v2203, 56
        %2205 = vset.pattern.permute.xlu0 %v2204
        %2206 = vperm.xlu0 %2205, %v2159
        %v2207 = vpop.permute.xlu0 %2206
        %v2208 = vlaneseq
        %v2209 = vshrl.u32 %v2208, 7
        %v2210 = vadd.s32 %v2209, 64
        %2211 = vset.pattern.permute.xlu0 %v2210
        %2212 = vperm.xlu0 %2211, %v2159
        %v2213 = vpop.permute.xlu0 %2212
        %v2214 = vlaneseq
        %v2215 = vshrl.u32 %v2214, 7
        %v2216 = vadd.s32 %v2215, 72
        %2217 = vset.pattern.permute.xlu0 %v2216
        %2218 = vperm.xlu0 %2217, %v2159
        %v2219 = vpop.permute.xlu0 %2218
        %v2220 = vlaneseq
        %v2221 = vshrl.u32 %v2220, 7
        %v2222 = vadd.s32 %v2221, 80
        %2223 = vset.pattern.permute.xlu0 %v2222
        %2224 = vperm.xlu0 %2223, %v2159
        %v2225 = vpop.permute.xlu0 %2224
        %v2226 = vlaneseq
        %v2227 = vshrl.u32 %v2226, 7
        %v2228 = vadd.s32 %v2227, 88
        %2229 = vset.pattern.permute.xlu0 %v2228
        %2230 = vperm.xlu0 %2229, %v2159
        %v2231 = vpop.permute.xlu0 %2230
        %v2232 = vlaneseq
        %v2233 = vshrl.u32 %v2232, 7
        %v2234 = vadd.s32 %v2233, 96
        %2235 = vset.pattern.permute.xlu0 %v2234
        %2236 = vperm.xlu0 %2235, %v2159
        %v2237 = vpop.permute.xlu0 %2236
        %v2238 = vlaneseq
        %v2239 = vshrl.u32 %v2238, 7
        %v2240 = vadd.s32 %v2239, 104
        %2241 = vset.pattern.permute.xlu0 %v2240
        %2242 = vperm.xlu0 %2241, %v2159
        %v2243 = vpop.permute.xlu0 %2242
        %v2244 = vlaneseq
        %v2245 = vshrl.u32 %v2244, 7
        %v2246 = vadd.s32 %v2245, 112
        %2247 = vset.pattern.permute.xlu0 %v2246
        %2248 = vperm.xlu0 %2247, %v2159
        %v2249 = vpop.permute.xlu0 %2248
        %v2250 = vlaneseq
        %v2251 = vshrl.u32 %v2250, 7
        %v2252 = vadd.s32 %v2251, 120
        %2253 = vset.pattern.permute.xlu0 %v2252
        %2254 = vperm.xlu0 %2253, %v2159
        %v2255 = vpop.permute.xlu0 %2254
        %v2256 = vperm.slane %v413, 7
        %v2257 = vlaneseq
        %v2258 = vshrl.u32 %v2257, 7
        %2260 = vset.pattern.permute.xlu0 %v2258
        %2261 = vperm.xlu0 %2260, %v2256
        %v2262 = vpop.permute.xlu0 %2261
        %v2263 = vlaneseq
        %v2264 = vshrl.u32 %v2263, 7
        %v2265 = vadd.s32 %v2264, 8
        %2266 = vset.pattern.permute.xlu0 %v2265
        %2267 = vperm.xlu0 %2266, %v2256
        %v2268 = vpop.permute.xlu0 %2267
        %v2269 = vlaneseq
        %v2270 = vshrl.u32 %v2269, 7
        %v2271 = vadd.s32 %v2270, 16
        %2272 = vset.pattern.permute.xlu0 %v2271
        %2273 = vperm.xlu0 %2272, %v2256
        %v2274 = vpop.permute.xlu0 %2273
        %v2275 = vlaneseq
        %v2276 = vshrl.u32 %v2275, 7
        %v2277 = vadd.s32 %v2276, 24
        %2278 = vset.pattern.permute.xlu0 %v2277
        %2279 = vperm.xlu0 %2278, %v2256
        %v2280 = vpop.permute.xlu0 %2279
        %v2281 = vlaneseq
        %v2282 = vshrl.u32 %v2281, 7
        %v2283 = vadd.s32 %v2282, 32
        %2284 = vset.pattern.permute.xlu0 %v2283
        %2285 = vperm.xlu0 %2284, %v2256
        %v2286 = vpop.permute.xlu0 %2285
        %v2287 = vlaneseq
        %v2288 = vshrl.u32 %v2287, 7
        %v2289 = vadd.s32 %v2288, 40
        %2290 = vset.pattern.permute.xlu0 %v2289
        %2291 = vperm.xlu0 %2290, %v2256
        %v2292 = vpop.permute.xlu0 %2291
        %v2293 = vlaneseq
        %v2294 = vshrl.u32 %v2293, 7
        %v2295 = vadd.s32 %v2294, 48
        %2296 = vset.pattern.permute.xlu0 %v2295
        %2297 = vperm.xlu0 %2296, %v2256
        %v2298 = vpop.permute.xlu0 %2297
        %v2299 = vlaneseq
        %v2300 = vshrl.u32 %v2299, 7
        %v2301 = vadd.s32 %v2300, 56
        %2302 = vset.pattern.permute.xlu0 %v2301
        %2303 = vperm.xlu0 %2302, %v2256
        %v2304 = vpop.permute.xlu0 %2303
        %v2305 = vlaneseq
        %v2306 = vshrl.u32 %v2305, 7
        %v2307 = vadd.s32 %v2306, 64
        %2308 = vset.pattern.permute.xlu0 %v2307
        %2309 = vperm.xlu0 %2308, %v2256
        %v2310 = vpop.permute.xlu0 %2309
        %v2311 = vlaneseq
        %v2312 = vshrl.u32 %v2311, 7
        %v2313 = vadd.s32 %v2312, 72
        %2314 = vset.pattern.permute.xlu0 %v2313
        %2315 = vperm.xlu0 %2314, %v2256
        %v2316 = vpop.permute.xlu0 %2315
        %v2317 = vlaneseq
        %v2318 = vshrl.u32 %v2317, 7
        %v2319 = vadd.s32 %v2318, 80
        %2320 = vset.pattern.permute.xlu0 %v2319
        %2321 = vperm.xlu0 %2320, %v2256
        %v2322 = vpop.permute.xlu0 %2321
        %v2323 = vlaneseq
        %v2324 = vshrl.u32 %v2323, 7
        %v2325 = vadd.s32 %v2324, 88
        %2326 = vset.pattern.permute.xlu0 %v2325
        %2327 = vperm.xlu0 %2326, %v2256
        %v2328 = vpop.permute.xlu0 %2327
        %v2329 = vlaneseq
        %v2330 = vshrl.u32 %v2329, 7
        %v2331 = vadd.s32 %v2330, 96
        %2332 = vset.pattern.permute.xlu0 %v2331
        %2333 = vperm.xlu0 %2332, %v2256
        %v2334 = vpop.permute.xlu0 %2333
        %v2335 = vlaneseq
        %v2336 = vshrl.u32 %v2335, 7
        %v2337 = vadd.s32 %v2336, 104
        %2338 = vset.pattern.permute.xlu0 %v2337
        %2339 = vperm.xlu0 %2338, %v2256
        %v2340 = vpop.permute.xlu0 %2339
        %v2341 = vlaneseq
        %v2342 = vshrl.u32 %v2341, 7
        %v2343 = vadd.s32 %v2342, 112
        %2344 = vset.pattern.permute.xlu0 %v2343
        %2345 = vperm.xlu0 %2344, %v2256
        %v2346 = vpop.permute.xlu0 %2345
        %v2347 = vlaneseq
        %v2348 = vshrl.u32 %v2347, 7
        %v2349 = vadd.s32 %v2348, 120
        %2350 = vset.pattern.permute.xlu0 %v2349
        %2351 = vperm.xlu0 %2350, %v2256
        %v2352 = vpop.permute.xlu0 %2351
        %v2353 = vmul.f32 %v1448, %v1583
        %v2354 = vmul.f32 %v1449, %v1589
        %v2355 = vmul.f32 %v1450, %v1595
        %v2356 = vmul.f32 %v1451, %v1601
        %v2357 = vmul.f32 %v1452, %v1607
        %v2358 = vmul.f32 %v1453, %v1613
        %v2359 = vmul.f32 %v1454, %v1619
        %v2360 = vmul.f32 %v1455, %v1625
        %v2361 = vmul.f32 %v1456, %v1631
        %v2362 = vmul.f32 %v1457, %v1637
        %v2363 = vmul.f32 %v1458, %v1643
        %v2364 = vmul.f32 %v1459, %v1649
        %v2365 = vmul.f32 %v1460, %v1655
        %v2366 = vmul.f32 %v1461, %v1661
        %v2367 = vmul.f32 %v1462, %v1667
        %v2368 = vmul.f32 %v1463, %v1673
        %v2369 = vmul.f32 %v1464, %v1680
        %v2370 = vmul.f32 %v1465, %v1686
        %v2371 = vmul.f32 %v1466, %v1692
        %v2372 = vmul.f32 %v1467, %v1698
        %v2373 = vmul.f32 %v1468, %v1704
        %v2374 = vmul.f32 %v1469, %v1710
        %v2375 = vmul.f32 %v1470, %v1716
        %v2376 = vmul.f32 %v1471, %v1722
        %v2377 = vmul.f32 %v1472, %v1728
        %v2378 = vmul.f32 %v1473, %v1734
        %v2379 = vmul.f32 %v1474, %v1740
        %v2380 = vmul.f32 %v1475, %v1746
        %v2381 = vmul.f32 %v1476, %v1752
        %v2382 = vmul.f32 %v1477, %v1758
        %v2383 = vmul.f32 %v1478, %v1764
        %v2384 = vmul.f32 %v1479, %v1770
        %v2385 = vmul.f32 %v1480, %v1777
        %v2386 = vmul.f32 %v1481, %v1783
        %v2387 = vmul.f32 %v1482, %v1789
        %v2388 = vmul.f32 %v1483, %v1795
        %v2389 = vmul.f32 %v1484, %v1801
        %v2390 = vmul.f32 %v1485, %v1807
        %v2391 = vmul.f32 %v1486, %v1813
        %v2392 = vmul.f32 %v1487, %v1819
        %v2393 = vmul.f32 %v1488, %v1825
        %v2394 = vmul.f32 %v1489, %v1831
        %v2395 = vmul.f32 %v1490, %v1837
        %v2396 = vmul.f32 %v1491, %v1843
        %v2397 = vmul.f32 %v1492, %v1849
        %v2398 = vmul.f32 %v1493, %v1855
        %v2399 = vmul.f32 %v1494, %v1861
        %v2400 = vmul.f32 %v1495, %v1867
        %v2401 = vmul.f32 %v1496, %v1874
        %v2402 = vmul.f32 %v1497, %v1880
        %v2403 = vmul.f32 %v1498, %v1886
        %v2404 = vmul.f32 %v1499, %v1892
        %v2405 = vmul.f32 %v1500, %v1898
        %v2406 = vmul.f32 %v1501, %v1904
        %v2407 = vmul.f32 %v1502, %v1910
        %v2408 = vmul.f32 %v1503, %v1916
        %v2409 = vmul.f32 %v1504, %v1922
        %v2410 = vmul.f32 %v1505, %v1928
        %v2411 = vmul.f32 %v1506, %v1934
        %v2412 = vmul.f32 %v1507, %v1940
        %v2413 = vmul.f32 %v1508, %v1946
        %v2414 = vmul.f32 %v1509, %v1952
        %v2415 = vmul.f32 %v1510, %v1958
        %v2416 = vmul.f32 %v1511, %v1964
        %v2417 = vmul.f32 %v1512, %v1971
        %v2418 = vmul.f32 %v1513, %v1977
        %v2419 = vmul.f32 %v1514, %v1983
        %v2420 = vmul.f32 %v1515, %v1989
        %v2421 = vmul.f32 %v1516, %v1995
        %v2422 = vmul.f32 %v1517, %v2001
        %v2423 = vmul.f32 %v1518, %v2007
        %v2424 = vmul.f32 %v1519, %v2013
        %v2425 = vmul.f32 %v1520, %v2019
        %v2426 = vmul.f32 %v1521, %v2025
        %v2427 = vmul.f32 %v1522, %v2031
        %v2428 = vmul.f32 %v1523, %v2037
        %v2429 = vmul.f32 %v1524, %v2043
        %v2430 = vmul.f32 %v1525, %v2049
        %v2431 = vmul.f32 %v1526, %v2055
        %v2432 = vmul.f32 %v1527, %v2061
        %v2433 = vmul.f32 %v1528, %v2068
        %v2434 = vmul.f32 %v1529, %v2074
        %v2435 = vmul.f32 %v1530, %v2080
        %v2436 = vmul.f32 %v1531, %v2086
        %v2437 = vmul.f32 %v1532, %v2092
        %v2438 = vmul.f32 %v1533, %v2098
        %v2439 = vmul.f32 %v1534, %v2104
        %v2440 = vmul.f32 %v1535, %v2110
        %v2441 = vmul.f32 %v1536, %v2116
        %v2442 = vmul.f32 %v1537, %v2122
        %v2443 = vmul.f32 %v1538, %v2128
        %v2444 = vmul.f32 %v1539, %v2134
        %v2445 = vmul.f32 %v1540, %v2140
        %v2446 = vmul.f32 %v1541, %v2146
        %v2447 = vmul.f32 %v1542, %v2152
        %v2448 = vmul.f32 %v1543, %v2158
        %v2449 = vmul.f32 %v1544, %v2165
        %v2450 = vmul.f32 %v1545, %v2171
        %v2451 = vmul.f32 %v1546, %v2177
        %v2452 = vmul.f32 %v1547, %v2183
        %v2453 = vmul.f32 %v1548, %v2189
        %v2454 = vmul.f32 %v1549, %v2195
        %v2455 = vmul.f32 %v1550, %v2201
        %v2456 = vmul.f32 %v1551, %v2207
        %v2457 = vmul.f32 %v1552, %v2213
        %v2458 = vmul.f32 %v1553, %v2219
        %v2459 = vmul.f32 %v1554, %v2225
        %v2460 = vmul.f32 %v1555, %v2231
        %v2461 = vmul.f32 %v1556, %v2237
        %v2462 = vmul.f32 %v1557, %v2243
        %v2463 = vmul.f32 %v1558, %v2249
        %v2464 = vmul.f32 %v1559, %v2255
        %v2465 = vmul.f32 %v1560, %v2262
        %v2466 = vmul.f32 %v1561, %v2268
        %v2467 = vmul.f32 %v1562, %v2274
        %v2468 = vmul.f32 %v1563, %v2280
        %v2469 = vmul.f32 %v1564, %v2286
        %v2470 = vmul.f32 %v1565, %v2292
        %v2471 = vmul.f32 %v1566, %v2298
        %v2472 = vmul.f32 %v1567, %v2304
        %v2473 = vmul.f32 %v1568, %v2310
        %v2474 = vmul.f32 %v1569, %v2316
        %v2475 = vmul.f32 %v1570, %v2322
        %v2476 = vmul.f32 %v1571, %v2328
        %v2477 = vmul.f32 %v1572, %v2334
        %v2478 = vmul.f32 %v1573, %v2340
        %v2479 = vmul.f32 %v1574, %v2346
        %v2480 = vmul.f32 %v1575, %v2352
        %vm2481 = vcmask 523264
        %v2482 = vsel %vm2481, %v2353, 0.0
        %v2483 = vsel %vm2481, %v2354, 0.0
        %v2484 = vadd.f32 %v2482, %v2483
        %v2485 = vsel %vm2481, %v2355, 0.0
        %v2486 = vadd.f32 %v2484, %v2485
        %v2487 = vsel %vm2481, %v2356, 0.0
        %v2488 = vadd.f32 %v2486, %v2487
        %v2489 = vsel %vm2481, %v2357, 0.0
        %v2490 = vadd.f32 %v2488, %v2489
        %v2491 = vsel %vm2481, %v2358, 0.0
        %v2492 = vadd.f32 %v2490, %v2491
        %v2493 = vsel %vm2481, %v2359, 0.0
        %v2494 = vadd.f32 %v2492, %v2493
        %v2495 = vsel %vm2481, %v2360, 0.0
        %v2496 = vadd.f32 %v2494, %v2495
        %v2497 = vsel %vm2481, %v2361, 0.0
        %v2498 = vadd.f32 %v2496, %v2497
        %v2499 = vsel %vm2481, %v2362, 0.0
        %v2500 = vadd.f32 %v2498, %v2499
        %v2501 = vsel %vm2481, %v2363, 0.0
        %v2502 = vadd.f32 %v2500, %v2501
        %v2503 = vsel %vm2481, %v2364, 0.0
        %v2504 = vadd.f32 %v2502, %v2503
        %v2505 = vsel %vm2481, %v2365, 0.0
        %v2506 = vadd.f32 %v2504, %v2505
        %v2507 = vsel %vm2481, %v2366, 0.0
        %v2508 = vadd.f32 %v2506, %v2507
        %v2509 = vsel %vm2481, %v2367, 0.0
        %v2510 = vadd.f32 %v2508, %v2509
        %v2511 = vsel %vm2481, %v2368, 0.0
        %v2512 = vadd.f32 %v2510, %v2511
        %v2513 = vrot.slane %v2512, 4
        %v2514 = vadd.f32 %v2512, %v2513
        %v2515 = vrot.slane %v2514, 2
        %v2516 = vadd.f32 %v2514, %v2515
        %v2517 = vrot.slane %v2516, 1
        %v2518 = vadd.f32 %v2516, %v2517
        %v2519 = vsel %vm2481, %v2369, 0.0
        %v2520 = vsel %vm2481, %v2370, 0.0
        %v2521 = vadd.f32 %v2519, %v2520
        %v2522 = vsel %vm2481, %v2371, 0.0
        %v2523 = vadd.f32 %v2521, %v2522
        %v2524 = vsel %vm2481, %v2372, 0.0
        %v2525 = vadd.f32 %v2523, %v2524
        %v2526 = vsel %vm2481, %v2373, 0.0
        %v2527 = vadd.f32 %v2525, %v2526
        %v2528 = vsel %vm2481, %v2374, 0.0
        %v2529 = vadd.f32 %v2527, %v2528
        %v2530 = vsel %vm2481, %v2375, 0.0
        %v2531 = vadd.f32 %v2529, %v2530
        %v2532 = vsel %vm2481, %v2376, 0.0
        %v2533 = vadd.f32 %v2531, %v2532
        %v2534 = vsel %vm2481, %v2377, 0.0
        %v2535 = vadd.f32 %v2533, %v2534
        %v2536 = vsel %vm2481, %v2378, 0.0
        %v2537 = vadd.f32 %v2535, %v2536
        %v2538 = vsel %vm2481, %v2379, 0.0
        %v2539 = vadd.f32 %v2537, %v2538
        %v2540 = vsel %vm2481, %v2380, 0.0
        %v2541 = vadd.f32 %v2539, %v2540
        %v2542 = vsel %vm2481, %v2381, 0.0
        %v2543 = vadd.f32 %v2541, %v2542
        %v2544 = vsel %vm2481, %v2382, 0.0
        %v2545 = vadd.f32 %v2543, %v2544
        %v2546 = vsel %vm2481, %v2383, 0.0
        %v2547 = vadd.f32 %v2545, %v2546
        %v2548 = vsel %vm2481, %v2384, 0.0
        %v2549 = vadd.f32 %v2547, %v2548
        %v2550 = vrot.slane %v2549, 4
        %v2551 = vadd.f32 %v2549, %v2550
        %v2552 = vrot.slane %v2551, 2
        %v2553 = vadd.f32 %v2551, %v2552
        %v2554 = vrot.slane %v2553, 1
        %v2555 = vadd.f32 %v2553, %v2554
        %v2556 = vsel %vm2481, %v2385, 0.0
        %v2557 = vsel %vm2481, %v2386, 0.0
        %v2558 = vadd.f32 %v2556, %v2557
        %v2559 = vsel %vm2481, %v2387, 0.0
        %v2560 = vadd.f32 %v2558, %v2559
        %v2561 = vsel %vm2481, %v2388, 0.0
        %v2562 = vadd.f32 %v2560, %v2561
        %v2563 = vsel %vm2481, %v2389, 0.0
        %v2564 = vadd.f32 %v2562, %v2563
        %v2565 = vsel %vm2481, %v2390, 0.0
        %v2566 = vadd.f32 %v2564, %v2565
        %v2567 = vsel %vm2481, %v2391, 0.0
        %v2568 = vadd.f32 %v2566, %v2567
        %v2569 = vsel %vm2481, %v2392, 0.0
        %v2570 = vadd.f32 %v2568, %v2569
        %v2571 = vsel %vm2481, %v2393, 0.0
        %v2572 = vadd.f32 %v2570, %v2571
        %v2573 = vsel %vm2481, %v2394, 0.0
        %v2574 = vadd.f32 %v2572, %v2573
        %v2575 = vsel %vm2481, %v2395, 0.0
        %v2576 = vadd.f32 %v2574, %v2575
        %v2577 = vsel %vm2481, %v2396, 0.0
        %v2578 = vadd.f32 %v2576, %v2577
        %v2579 = vsel %vm2481, %v2397, 0.0
        %v2580 = vadd.f32 %v2578, %v2579
        %v2581 = vsel %vm2481, %v2398, 0.0
        %v2582 = vadd.f32 %v2580, %v2581
        %v2583 = vsel %vm2481, %v2399, 0.0
        %v2584 = vadd.f32 %v2582, %v2583
        %v2585 = vsel %vm2481, %v2400, 0.0
        %v2586 = vadd.f32 %v2584, %v2585
        %v2587 = vrot.slane %v2586, 4
        %v2588 = vadd.f32 %v2586, %v2587
        %v2589 = vrot.slane %v2588, 2
        %v2590 = vadd.f32 %v2588, %v2589
        %v2591 = vrot.slane %v2590, 1
        %v2592 = vadd.f32 %v2590, %v2591
        %v2593 = vsel %vm2481, %v2401, 0.0
        %v2594 = vsel %vm2481, %v2402, 0.0
        %v2595 = vadd.f32 %v2593, %v2594
        %v2596 = vsel %vm2481, %v2403, 0.0
        %v2597 = vadd.f32 %v2595, %v2596
        %v2598 = vsel %vm2481, %v2404, 0.0
        %v2599 = vadd.f32 %v2597, %v2598
        %v2600 = vsel %vm2481, %v2405, 0.0
        %v2601 = vadd.f32 %v2599, %v2600
        %v2602 = vsel %vm2481, %v2406, 0.0
        %v2603 = vadd.f32 %v2601, %v2602
        %v2604 = vsel %vm2481, %v2407, 0.0
        %v2605 = vadd.f32 %v2603, %v2604
        %v2606 = vsel %vm2481, %v2408, 0.0
        %v2607 = vadd.f32 %v2605, %v2606
        %v2608 = vsel %vm2481, %v2409, 0.0
        %v2609 = vadd.f32 %v2607, %v2608
        %v2610 = vsel %vm2481, %v2410, 0.0
        %v2611 = vadd.f32 %v2609, %v2610
        %v2612 = vsel %vm2481, %v2411, 0.0
        %v2613 = vadd.f32 %v2611, %v2612
        %v2614 = vsel %vm2481, %v2412, 0.0
        %v2615 = vadd.f32 %v2613, %v2614
        %v2616 = vsel %vm2481, %v2413, 0.0
        %v2617 = vadd.f32 %v2615, %v2616
        %v2618 = vsel %vm2481, %v2414, 0.0
        %v2619 = vadd.f32 %v2617, %v2618
        %v2620 = vsel %vm2481, %v2415, 0.0
        %v2621 = vadd.f32 %v2619, %v2620
        %v2622 = vsel %vm2481, %v2416, 0.0
        %v2623 = vadd.f32 %v2621, %v2622
        %v2624 = vrot.slane %v2623, 4
        %v2625 = vadd.f32 %v2623, %v2624
        %v2626 = vrot.slane %v2625, 2
        %v2627 = vadd.f32 %v2625, %v2626
        %v2628 = vrot.slane %v2627, 1
        %v2629 = vadd.f32 %v2627, %v2628
        %v2630 = vsel %vm2481, %v2417, 0.0
        %v2631 = vsel %vm2481, %v2418, 0.0
        %v2632 = vadd.f32 %v2630, %v2631
        %v2633 = vsel %vm2481, %v2419, 0.0
        %v2634 = vadd.f32 %v2632, %v2633
        %v2635 = vsel %vm2481, %v2420, 0.0
        %v2636 = vadd.f32 %v2634, %v2635
        %v2637 = vsel %vm2481, %v2421, 0.0
        %v2638 = vadd.f32 %v2636, %v2637
        %v2639 = vsel %vm2481, %v2422, 0.0
        %v2640 = vadd.f32 %v2638, %v2639
        %v2641 = vsel %vm2481, %v2423, 0.0
        %v2642 = vadd.f32 %v2640, %v2641
        %v2643 = vsel %vm2481, %v2424, 0.0
        %v2644 = vadd.f32 %v2642, %v2643
        %v2645 = vsel %vm2481, %v2425, 0.0
        %v2646 = vadd.f32 %v2644, %v2645
        %v2647 = vsel %vm2481, %v2426, 0.0
        %v2648 = vadd.f32 %v2646, %v2647
        %v2649 = vsel %vm2481, %v2427, 0.0
        %v2650 = vadd.f32 %v2648, %v2649
        %v2651 = vsel %vm2481, %v2428, 0.0
        %v2652 = vadd.f32 %v2650, %v2651
        %v2653 = vsel %vm2481, %v2429, 0.0
        %v2654 = vadd.f32 %v2652, %v2653
        %v2655 = vsel %vm2481, %v2430, 0.0
        %v2656 = vadd.f32 %v2654, %v2655
        %v2657 = vsel %vm2481, %v2431, 0.0
        %v2658 = vadd.f32 %v2656, %v2657
        %v2659 = vsel %vm2481, %v2432, 0.0
        %v2660 = vadd.f32 %v2658, %v2659
        %v2661 = vrot.slane %v2660, 4
        %v2662 = vadd.f32 %v2660, %v2661
        %v2663 = vrot.slane %v2662, 2
        %v2664 = vadd.f32 %v2662, %v2663
        %v2665 = vrot.slane %v2664, 1
        %v2666 = vadd.f32 %v2664, %v2665
        %v2667 = vsel %vm2481, %v2433, 0.0
        %v2668 = vsel %vm2481, %v2434, 0.0
        %v2669 = vadd.f32 %v2667, %v2668
        %v2670 = vsel %vm2481, %v2435, 0.0
        %v2671 = vadd.f32 %v2669, %v2670
        %v2672 = vsel %vm2481, %v2436, 0.0
        %v2673 = vadd.f32 %v2671, %v2672
        %v2674 = vsel %vm2481, %v2437, 0.0
        %v2675 = vadd.f32 %v2673, %v2674
        %v2676 = vsel %vm2481, %v2438, 0.0
        %v2677 = vadd.f32 %v2675, %v2676
        %v2678 = vsel %vm2481, %v2439, 0.0
        %v2679 = vadd.f32 %v2677, %v2678
        %v2680 = vsel %vm2481, %v2440, 0.0
        %v2681 = vadd.f32 %v2679, %v2680
        %v2682 = vsel %vm2481, %v2441, 0.0
        %v2683 = vadd.f32 %v2681, %v2682
        %v2684 = vsel %vm2481, %v2442, 0.0
        %v2685 = vadd.f32 %v2683, %v2684
        %v2686 = vsel %vm2481, %v2443, 0.0
        %v2687 = vadd.f32 %v2685, %v2686
        %v2688 = vsel %vm2481, %v2444, 0.0
        %v2689 = vadd.f32 %v2687, %v2688
        %v2690 = vsel %vm2481, %v2445, 0.0
        %v2691 = vadd.f32 %v2689, %v2690
        %v2692 = vsel %vm2481, %v2446, 0.0
        %v2693 = vadd.f32 %v2691, %v2692
        %v2694 = vsel %vm2481, %v2447, 0.0
        %v2695 = vadd.f32 %v2693, %v2694
        %v2696 = vsel %vm2481, %v2448, 0.0
        %v2697 = vadd.f32 %v2695, %v2696
        %v2698 = vrot.slane %v2697, 4
        %v2699 = vadd.f32 %v2697, %v2698
        %v2700 = vrot.slane %v2699, 2
        %v2701 = vadd.f32 %v2699, %v2700
        %v2702 = vrot.slane %v2701, 1
        %v2703 = vadd.f32 %v2701, %v2702
        %v2704 = vsel %vm2481, %v2449, 0.0
        %v2705 = vsel %vm2481, %v2450, 0.0
        %v2706 = vadd.f32 %v2704, %v2705
        %v2707 = vsel %vm2481, %v2451, 0.0
        %v2708 = vadd.f32 %v2706, %v2707
        %v2709 = vsel %vm2481, %v2452, 0.0
        %v2710 = vadd.f32 %v2708, %v2709
        %v2711 = vsel %vm2481, %v2453, 0.0
        %v2712 = vadd.f32 %v2710, %v2711
        %v2713 = vsel %vm2481, %v2454, 0.0
        %v2714 = vadd.f32 %v2712, %v2713
        %v2715 = vsel %vm2481, %v2455, 0.0
        %v2716 = vadd.f32 %v2714, %v2715
        %v2717 = vsel %vm2481, %v2456, 0.0
        %v2718 = vadd.f32 %v2716, %v2717
        %v2719 = vsel %vm2481, %v2457, 0.0
        %v2720 = vadd.f32 %v2718, %v2719
        %v2721 = vsel %vm2481, %v2458, 0.0
        %v2722 = vadd.f32 %v2720, %v2721
        %v2723 = vsel %vm2481, %v2459, 0.0
        %v2724 = vadd.f32 %v2722, %v2723
        %v2725 = vsel %vm2481, %v2460, 0.0
        %v2726 = vadd.f32 %v2724, %v2725
        %v2727 = vsel %vm2481, %v2461, 0.0
        %v2728 = vadd.f32 %v2726, %v2727
        %v2729 = vsel %vm2481, %v2462, 0.0
        %v2730 = vadd.f32 %v2728, %v2729
        %v2731 = vsel %vm2481, %v2463, 0.0
        %v2732 = vadd.f32 %v2730, %v2731
        %v2733 = vsel %vm2481, %v2464, 0.0
        %v2734 = vadd.f32 %v2732, %v2733
        %v2735 = vrot.slane %v2734, 4
        %v2736 = vadd.f32 %v2734, %v2735
        %v2737 = vrot.slane %v2736, 2
        %v2738 = vadd.f32 %v2736, %v2737
        %v2739 = vrot.slane %v2738, 1
        %v2740 = vadd.f32 %v2738, %v2739
        %v2741 = vsel %vm2481, %v2465, 0.0
        %v2742 = vsel %vm2481, %v2466, 0.0
        %v2743 = vadd.f32 %v2741, %v2742
        %v2744 = vsel %vm2481, %v2467, 0.0
        %v2745 = vadd.f32 %v2743, %v2744
        %v2746 = vsel %vm2481, %v2468, 0.0
        %v2747 = vadd.f32 %v2745, %v2746
        %v2748 = vsel %vm2481, %v2469, 0.0
        %v2749 = vadd.f32 %v2747, %v2748
        %v2750 = vsel %vm2481, %v2470, 0.0
        %v2751 = vadd.f32 %v2749, %v2750
        %v2752 = vsel %vm2481, %v2471, 0.0
        %v2753 = vadd.f32 %v2751, %v2752
        %v2754 = vsel %vm2481, %v2472, 0.0
        %v2755 = vadd.f32 %v2753, %v2754
        %v2756 = vsel %vm2481, %v2473, 0.0
        %v2757 = vadd.f32 %v2755, %v2756
        %v2758 = vsel %vm2481, %v2474, 0.0
        %v2759 = vadd.f32 %v2757, %v2758
        %v2760 = vsel %vm2481, %v2475, 0.0
        %v2761 = vadd.f32 %v2759, %v2760
        %v2762 = vsel %vm2481, %v2476, 0.0
        %v2763 = vadd.f32 %v2761, %v2762
        %v2764 = vsel %vm2481, %v2477, 0.0
        %v2765 = vadd.f32 %v2763, %v2764
        %v2766 = vsel %vm2481, %v2478, 0.0
        %v2767 = vadd.f32 %v2765, %v2766
        %v2768 = vsel %vm2481, %v2479, 0.0
        %v2769 = vadd.f32 %v2767, %v2768
        %v2770 = vsel %vm2481, %v2480, 0.0
        %v2771 = vadd.f32 %v2769, %v2770
        %v2772 = vrot.slane %v2771, 4
        %v2773 = vadd.f32 %v2771, %v2772
        %v2774 = vrot.slane %v2773, 2
        %v2775 = vadd.f32 %v2773, %v2774
        %v2776 = vrot.slane %v2775, 1
        %v2777 = vadd.f32 %v2775, %v2776
        %vm2786 = vcmask 1041409
        %v2787 = vsel %vm2786, %v2555, %v2518
        %vm2788 = vcmask 1042434
        %v2789 = vsel %vm2788, %v2592, %v2787
        %vm2790 = vcmask 1043459
        %v2791 = vsel %vm2790, %v2629, %v2789
        %vm2792 = vcmask 1044484
        %v2793 = vsel %vm2792, %v2666, %v2791
        %vm2794 = vcmask 1045509
        %v2795 = vsel %vm2794, %v2703, %v2793
        %vm2796 = vcmask 1046534
        %v2797 = vsel %vm2796, %v2740, %v2795
        %vm2798 = vcmask 1047559
        %v2799 = vsel %vm2798, %v2777, %v2797
        %v2801 = vadd.f32 %v1576, %v2799
        %2802 = vst.msk [vmem:[#allocation2] sm:$0xff] %vm2481, %v2801
        %v2803 = vld [vmem:[#allocation3] sm:$0xff]
        %2804 = vadd.xlane.f32.xlu0 %v413
        %v2805 = vpop.xlane.xlu0 %2804
        %v2806 = vadd.f32 %v2803, %v2805
        %vm2807 = vcmask 7168
        %2808 = vst.msk [vmem:[#allocation3] sm:$0xff] %vm2807, %v2806
        %p2809 = scmp.eq.s32.totalorder %s33, 1
        // Predicated region
        $region73: #{tpu_custom_call.1} parent=47 // pred_check
          %p2810 = pneg %p2809
        $region74: #{tpu_custom_call.1} parent=47 // pred_check_branch
          %2812 = sbr.rel (%p2810) target = $region76
        $region75: #{tpu_custom_call.1} parent=47 // pred_region
          %v2813 = vld [vmem:[#allocation2] sm:$0xff]
          %v2814 = vld [vmem:[#allocation3] sm:$0xff]
          %v2815 = vmax.f32 %v2814, 1.0
          %v2816 = vld [vmem:[#allocation9] sm:$0xf]
          %v2817 = vld [vmem:[#allocation9 + $0x4] sm:$0xf]
          %v2818 = vld [vmem:[#allocation9 + $0x8] sm:$0xf]
          %v2819 = vld [vmem:[#allocation9 + $0xc] sm:$0xf]
          %v2820 = vld [vmem:[#allocation9 + $0x10] sm:$0xf]
          %v2821 = vld [vmem:[#allocation9 + $0x14] sm:$0xf]
          %v2822 = vld [vmem:[#allocation9 + $0x18] sm:$0xf]
          %v2823 = vld [vmem:[#allocation9 + $0x1c] sm:$0xf]
          %v2824 = vunpack.c.l.bf16 %v2816
          %v2825 = vunpack.c.l.bf16 %v2817
          %v2826 = vunpack.c.l.bf16 %v2818
          %v2827 = vunpack.c.l.bf16 %v2819
          %v2828 = vunpack.c.l.bf16 %v2820
          %v2829 = vunpack.c.l.bf16 %v2821
          %v2830 = vunpack.c.l.bf16 %v2822
          %v2831 = vunpack.c.l.bf16 %v2823
          %v2833 = vsel %vm2481, %v2813, 0
          %2835 = vmatpush.msra.mxu0 0.0
          %2836 = vmatpush.msra.mxu0 0.0
          %2837 = vmatpush.msra.mxu0 0.0
          %2838 = vmatpush.msra.mxu0 0.0
          %2839 = vmatpush.msra.mxu0 0.0
          %2840 = vmatpush.msra.mxu0 0.0
          %2841 = vmatpush.msra.mxu0 0.0
          %2842 = vmatpush.msra.mxu0 0.0
          %2843 = vmatpush.msra.mxu0 %v2831
          %2844 = vmatpush.msra.mxu0 %v2830
          %2845 = vmatpush.msra.mxu0 %v2829
          %2846 = vmatpush.msra.mxu0 %v2828
          %2847 = vmatpush.msra.mxu0 %v2827
          %2848 = vmatpush.msra.mxu0 %v2826
          %2849 = vmatpush.msra.mxu0 %v2825
          %2850 = vmatpush.msra.mxu0 %v2824
          %2851 = vmatmul.f32.gmra.mxu0 %v2833
          %v2852 = vpop.f32.mrf.mxu0
          %v2853 = vadd.f32 0.0, %v2852
          %2854 = vdwg.mxu0
          %2856 = vset.pattern.permute.xlu0 0
          %2857 = vperm.xlu0 %2856, %v2815
          %v2858 = vpop.permute.xlu0 %2857
          %v2860 = vrcp.pop %v2858
          %v2861 = vmul.f32 %v2858, %v2860
          %v2862 = vsub.f32 1.0, %v2861
          %v2863 = vmul.f32 %v2860, %v2862
          %v2864 = vadd.f32 %v2860, %v2863
          %vm2865 = vweird.f32 %v2858
          %vm2866 = vweird.f32 %v2860
          %vm2867 = vmor %vm2865, %vm2866
          %v2868 = vsel %vm2867, %v2860, %v2864
          %v2869 = vand.u32 2147483647, %v2858
          %vm2870 = vcmp.eq.f32.partialorder %v2869, 8.507059e+37
          %v2871 = vand.u32 %v2858, 2147483648
          %v2872 = vor.u32 1.1754944e-38, %v2871
          %v2873 = vsel %vm2870, %v2872, %v2868
          %v2874 = vmul.f32 %v2853, %v2873
          %v2875 = vld [vmem:[#allocation10] sm:$0xff]
          %v2876 = vld [vmem:[#allocation10 + $0x8] sm:$0xff]
          %v2877 = vld [vmem:[#allocation10 + $0x10] sm:$0xff]
          %v2878 = vld [vmem:[#allocation10 + $0x18] sm:$0xff]
          %v2879 = vld [vmem:[#allocation10 + $0x20] sm:$0xff]
          %v2880 = vld [vmem:[#allocation10 + $0x28] sm:$0xff]
          %v2881 = vld [vmem:[#allocation10 + $0x30] sm:$0xff]
          %v2882 = vld [vmem:[#allocation10 + $0x38] sm:$0xff]
          %v2883 = vld [vmem:[#allocation10 + $0x40] sm:$0xff]
          %v2884 = vld [vmem:[#allocation10 + $0x48] sm:$0xff]
          %v2885 = vld [vmem:[#allocation10 + $0x50] sm:$0xff]
          %v2886 = vld [vmem:[#allocation10 + $0x58] sm:$0xff]
          %v2887 = vld [vmem:[#allocation10 + $0x60] sm:$0xff]
          %v2888 = vld [vmem:[#allocation10 + $0x68] sm:$0xff]
          %v2889 = vld [vmem:[#allocation10 + $0x70] sm:$0xff]
          %v2890 = vld [vmem:[#allocation10 + $0x78] sm:$0xff]
          %v2891 = vld [vmem:[%s4] sm:$0x1]
          %v2893 = vperm.slane %v2891, 0
          %2895 = vmatpush.msra.mxu0 %v2890
          %2896 = vmatpush.msra.mxu0 %v2889
          %2897 = vmatpush.msra.mxu0 %v2888
          %2898 = vmatpush.msra.mxu0 %v2887
          %2899 = vmatpush.msra.mxu0 %v2886
          %2900 = vmatpush.msra.mxu0 %v2885
          %2901 = vmatpush.msra.mxu0 %v2884
          %2902 = vmatpush.msra.mxu0 %v2883
          %2903 = vmatpush.msra.mxu0 %v2882
          %2904 = vmatpush.msra.mxu0 %v2881
          %2905 = vmatpush.msra.mxu0 %v2880
          %2906 = vmatpush.msra.mxu0 %v2879
          %2907 = vmatpush.msra.mxu0 %v2878
          %2908 = vmatpush.msra.mxu0 %v2877
          %2909 = vmatpush.msra.mxu0 %v2876
          %2910 = vmatpush.msra.mxu0 %v2875
          %2911 = vmatmul.f32.gmra.mxu0 %v2874
          %v2912 = vpop.f32.mrf.mxu0
          %v2913 = vadd.f32 %v2893, %v2912
          %2914 = vdwg.mxu0
          %v2915 = vtanh.pop %v2913
          %v2916 = vld [vmem:[#allocation12] sm:$0xff]
          %v2917 = vld [vmem:[#allocation12 + $0x8] sm:$0xff]
          %v2918 = vld [vmem:[#allocation12 + $0x10] sm:$0xff]
          %v2919 = vld [vmem:[#allocation12 + $0x18] sm:$0xff]
          %v2920 = vld [vmem:[#allocation12 + $0x20] sm:$0xff]
          %v2921 = vld [vmem:[#allocation12 + $0x28] sm:$0xff]
          %v2922 = vld [vmem:[#allocation12 + $0x30] sm:$0xff]
          %v2923 = vld [vmem:[#allocation12 + $0x38] sm:$0xff]
          %v2924 = vld [vmem:[#allocation12 + $0x40] sm:$0xff]
          %v2925 = vld [vmem:[#allocation12 + $0x48] sm:$0xff]
          %v2926 = vld [vmem:[#allocation12 + $0x50] sm:$0xff]
          %v2927 = vld [vmem:[#allocation12 + $0x58] sm:$0xff]
          %v2928 = vld [vmem:[#allocation12 + $0x60] sm:$0xff]
          %v2929 = vld [vmem:[#allocation12 + $0x68] sm:$0xff]
          %v2930 = vld [vmem:[#allocation12 + $0x70] sm:$0xff]
          %v2931 = vld [vmem:[#allocation12 + $0x78] sm:$0xff]
          %v2932 = vld [vmem:[%s6] sm:$0x1]
          %v2934 = vperm.slane %v2932, 0
          %2936 = vmatpush.msra.mxu0 %v2931
          %2937 = vmatpush.msra.mxu0 %v2930
          %2938 = vmatpush.msra.mxu0 %v2929
          %2939 = vmatpush.msra.mxu0 %v2928
          %2940 = vmatpush.msra.mxu0 %v2927
          %2941 = vmatpush.msra.mxu0 %v2926
          %2942 = vmatpush.msra.mxu0 %v2925
          %2943 = vmatpush.msra.mxu0 %v2924
          %2944 = vmatpush.msra.mxu0 %v2923
          %2945 = vmatpush.msra.mxu0 %v2922
          %2946 = vmatpush.msra.mxu0 %v2921
          %2947 = vmatpush.msra.mxu0 %v2920
          %2948 = vmatpush.msra.mxu0 %v2919
          %2949 = vmatpush.msra.mxu0 %v2918
          %2950 = vmatpush.msra.mxu0 %v2917
          %2951 = vmatpush.msra.mxu0 %v2916
          %2952 = vmatmul.f32.gmra.mxu0 %v2915
          %v2953 = vpop.f32.mrf.mxu0
          %v2954 = vadd.f32 %v2934, %v2953
          %2955 = vdwg.mxu0
          %2956 = vst [vmem:[%s403] sm:$0xff] %v2954
        $region76: #{tpu_custom_call.1} parent=47 // pred_fallthru
          _
        %s2957 = sand.u32 %s209, 1
        %s2958 = scalar_lea.sflag [#allocation6], %s2957
        %s2959 = sand.u32 %s209, 1
        %s2960 = smul.addr %s2959, 8
        %s2961 = scalar_lea.vmem [#allocation13], %s2960
        // Predicated region
        $region77: #{tpu_custom_call.1} parent=47 // pred_check
          %p2962 = pneg %p219
        $region78: #{tpu_custom_call.1} parent=47 // pred_check_branch
          %2964 = sbr.rel (%p2962) target = $region80
        $region79: #{tpu_custom_call.1} parent=47 // pred_region
          %2966 = vsyncadd %s2958, 0
          %s2967 = smul.addr %s32, 8
          %s2968 = scalar_lea.hbm %s7, %s2967
          %s2970 = sshll.u32 %s2961, 4
          %s2971 = int_to_ptr.vmem [resolvable:$true] %s2970
          %s2972 = sshll.u32 %s2968, 4
          %s2973 = int_to_ptr.hbm [resolvable:$true] %s2972
          %2975 = dma.vmem_to_hbm [thread:$0]  %s2971, 128, %s2973, %s2958
        $region80: #{tpu_custom_call.1} parent=47 // pred_fallthru
          _
      $region48: #{tpu_custom_call.1} parent=5 // pred_fallthru
        _
      %p2976 = scmp.le.s32.totalorder 2, %s23
      // Predicated region
      $region81: #{tpu_custom_call.1} parent=5 // pred_check
        %p2977 = pneg %p2976
      $region82: #{tpu_custom_call.1} parent=5 // pred_check_branch
        %2979 = sbr.rel (%p2977) target = $region84
      $region83: #{tpu_custom_call.1} parent=5 // pred_region
        %s2980 = ssub.s32 %s23, 2
        // Predicated region
        $region85: #{tpu_custom_call.1} parent=83 // pred_check
          %p2981 = pneg %p225
        $region86: #{tpu_custom_call.1} parent=83 // pred_check_branch
          %2983 = sbr.rel (%p2981) target = $region88
        $region87: #{tpu_custom_call.1} parent=83 // pred_region
          %s2984 = sand.u32 %s210, 1
          %s2985 = scalar_lea.sflag [#allocation6], %s2984
          %s2986 = sand.u32 %s210, 1
          %s2987 = smul.addr %s2986, 8
          %s2988 = scalar_lea.vmem [#allocation13], %s2987
          %2990 = dma.done %s2985, 128
        $region88: #{tpu_custom_call.1} parent=83 // pred_fallthru
          _
      $region84: #{tpu_custom_call.1} parent=5 // pred_fallthru
        _
    $region6: #{tpu_custom_call.1} parent=1 // loop_footer
      %s27 = sadd.s32 1, %s23
    $region7: #{tpu_custom_call.1} parent=1 // loop_footer_branch
      %22 = sbr.rel target = $region3
    $region8: #{tpu_custom_call.1} parent=1 // loop_exit
      _
    %2991 = vsyncpa [#allocation5], 1
    %s2992 = scalar_lea.sflag [#allocation5], 1
    %2993 = vsyncpa %s2992, 1
    %2994 = vsyncpa [#allocation8], 1
    %s2995 = scalar_lea.sflag [#allocation8], 1
    %2996 = vsyncpa %s2995, 1
    %2997 = vsyncpa [#allocation11], 1
    %2998 = vsyncpa [#allocation6], 1
    %s2999 = scalar_lea.sflag [#allocation6], 1
    %3000 = vsyncpa %s2999, 1

</llo_original>
